<compile_context>
chip_gen: v5e
topology: v5e:2x2
jax: 0.10.0
libtpu: 0.0.40
codegen_flags: <defaults>
</compile_context>

<pallas_src>
import functools

import jax
import jax.numpy as jnp
from jax import lax
from jax.experimental import pallas as pl
from jax.experimental.pallas import tpu as pltpu


# ----------------------------------------------------------------------------
# Fused Pallas kernel: Toeplitz branch conv + BN bias + SiLU + 1x1 channel conv
# ----------------------------------------------------------------------------
def _grid_conv_kernel(x_ref, t_ref, bnb_ref, ccw_ref, ccb_ref, o_ref,
                      *, Cout, Ho, Wo):
    """One (branch, batch-block) step of the fused GridConv.

    x_ref:   (nb, Cin, Hh*W)          one H-half of nb images, NCHW-flat (lane-dense)
    t_ref:   (Cin*Hh*W, Cout*Ho*Wo)   bf16 Toeplitz conv weights, BN scale folded
    bnb_ref: (Cout, 1)                folded BN bias (f32)
    ccw_ref: (Cout, Cout)             bf16 1x1 channel_conv weights, [o, c] order
    ccb_ref: (Cout, 1)                channel_conv bias (f32)
    o_ref:   (nb, Cout, Ho*Wo)        NCHW-flat output block (this branch's rows)
    """
    nb = x_ref.shape[0]

    # Cast once at the MXU boundary; flatten each image to one row vector.
    xf = x_ref[...].astype(jnp.bfloat16).reshape(nb, -1)          # (nb, Cin*Hh*W)

    # Branch conv (+ folded BN scale) as ONE exact Toeplitz matmul.  Columns of
    # T are already NCHW-ordered (co, ho, wo); zero halo padding is implicit.
    acc = jnp.dot(xf, t_ref[...],
                  preferred_element_type=jnp.float32)             # (nb, Cout*Ho*Wo)

    # BN bias + SiLU epilogue in f32 (v5e-friendly).
    y = acc.reshape(nb, Cout, Ho * Wo) + bnb_ref[...][None]       # (nb, Cout, Ho*Wo)
    y = y * jax.nn.sigmoid(y)                                     # SiLU

    # Fused 1x1 channel_conv: per-image (Cout, Cout) @ (Cout, Ho*Wo) on the MXU.
    # nb is static & small -> unrolled plain 2-D dots (robust Mosaic lowering).
    ccw = ccw_ref[...]
    ccb = ccb_ref[...]
    yb = y.astype(jnp.bfloat16)
    for n in range(nb):
        o_ref[n] = (jnp.dot(ccw, yb[n], preferred_element_type=jnp.float32)
                    + ccb).astype(o_ref.dtype)


# ----------------------------------------------------------------------------
# Wrapper
# ----------------------------------------------------------------------------
@functools.partial(jax.jit, static_argnames=("stride", "batch_block"))
def grid_conv_forward(x_nchw, params, stride=1, batch_block=None):
    """GridConv.forward. Input/output NCHW (PyTorch convention), no transposes."""
    N, Cin, H, W = x_nchw.shape
    split = int(W // 2)        # PyTorch quirk: split index from W, applied on H
    if H != 2 * split:
        raise ValueError(f"GridConv split quirk requires H == 2*(W//2); got H={H}, W={W}")
    Hh = split
    Ho = (Hh - 1) // stride + 1        # 'same' output size for both 3x3/p1 and 5x5/p2
    Wo = (W - 1) // stride + 1
    Cout = params["cc_b"].shape[0]
    Kdim = Cin * Hh * W
    Ndim = Cout * Ho * Wo
    if (Hh * W) % 128 != 0 or (Ho * Wo) % 128 != 0:
        raise ValueError(
            f"lane-dense blocks require Hh*W and Ho*Wo to be multiples of 128; "
            f"got Hh*W={Hh * W}, Ho*Wo={Ho * Wo}")
    if params["toeplitz"].shape != (2, Kdim, Ndim):
        raise ValueError("params were prepared for different spatial dims / stride")

    nb = N if batch_block is None else batch_block
    if N % nb != 0:
        raise ValueError(f"batch_block={nb} must divide N={N}")

    # Free, layout-preserving views: NCHW with flattened spatial dims.
    x_flat = x_nchw.reshape(N, Cin, H * W)

    kernel = functools.partial(_grid_conv_kernel, Cout=Cout, Ho=Ho, Wo=Wo)

    cost = pl.CostEstimate(
        flops=2 * (2 * N * Kdim * Ndim) + 2 * N * 2 * Cout * Cout * Ho * Wo,
        transcendentals=2 * N * Cout * Ho * Wo,
        bytes_accessed=(N * Cin * H * W * x_nchw.dtype.itemsize
                        + 2 * Kdim * Ndim * 2
                        + N * Cout * 2 * Ho * Wo * x_nchw.dtype.itemsize))

    out_flat = pl.pallas_call(
        kernel,
        grid=(2, N // nb),                                   # (branch, batch-block)
        out_shape=jax.ShapeDtypeStruct((N, Cout, 2 * Ho * Wo), x_nchw.dtype),
        in_specs=[
            # H-split of the input: branch b reads the flat-spatial slab
            # [b*Hh*W, (b+1)*Hh*W) of every image in the batch block.
            pl.BlockSpec((nb, Cin, Hh * W), lambda b, n: (n, 0, b)),
            pl.BlockSpec((None, Kdim, Ndim), lambda b, n: (b, 0, 0)),
            pl.BlockSpec((None, Cout, 1), lambda b, n: (b, 0, 0)),
            pl.BlockSpec((Cout, Cout), lambda b, n: (0, 0)),
            pl.BlockSpec((Cout, 1), lambda b, n: (0, 0)),
        ],
        # H-concat of the branches: branch b writes flat output rows [b*Ho*Wo, ...).
        out_specs=pl.BlockSpec((nb, Cout, Ho * Wo), lambda b, n: (n, 0, b)),
        compiler_params=pltpu.CompilerParams(
            dimension_semantics=("parallel", "parallel")),
        cost_estimate=cost,
    )(x_flat, params["toeplitz"], params["bn_bias"], params["cc_w"], params["cc_b"])

    return out_flat.reshape(N, Cout, 2 * Ho, Wo)             # free NCHW view


# ----------------------------------------------------------------------------
# Parameter preparation (host-side, one-time)
# ----------------------------------------------------------------------------
def _conv_toeplitz(w_oihw, scale, Hin, Win, Ho, Wo, stride):
    """Exact Toeplitz matrix of a 'same'-padded conv (BN scale folded).

    T[(ci, h, w), (co, ho, wo)] = scale[co] * w[co, ci, h - ho*s + ph, w - wo*s + pw]
    when the kernel index is in range, else 0 (implicit zero halo padding)."""
    Cout, Cin, KH, KW = w_oihw.shape
    ph, pw = (KH - 1) // 2, (KW - 1) // 2
    sel_h = (jnp.arange(Hin)[:, None, None]
             == jnp.arange(Ho)[None, :, None] * stride
             + jnp.arange(KH)[None, None, :] - ph).astype(jnp.float32)   # (Hin, Ho, KH)
    sel_w = (jnp.arange(Win)[:, None, None]
             == jnp.arange(Wo)[None, :, None] * stride
             + jnp.arange(KW)[None, None, :] - pw).astype(jnp.float32)   # (Win, Wo, KW)
    w_s = w_oihw.astype(jnp.float32) * scale[:, None, None, None]
    t = jnp.einsum('oikl,hyk,wzl->ihwoyz', w_s, sel_h, sel_w)
    return t.reshape(Cin * Hin * Win, Cout * Ho * Wo)


def prepare_grid_conv_params(raw, H, W, stride=1, mxu_dtype=jnp.bfloat16):
    """Build per-branch Toeplitz conv weights (BN scale folded) + biases.

    `raw` uses PyTorch layouts: conv (Cout, Cin, KH, KW); cc_w (Cout, Cin);
    BN folded to per-channel scale/bias of shape (Cout,)."""
    split = W // 2
    if H != 2 * split:
        raise ValueError(f"GridConv split quirk requires H == 2*(W//2); got H={H}, W={W}")
    Hh = split
    Ho = (Hh - 1) // stride + 1
    Wo = (W - 1) // stride + 1
    Cout = raw["top_w"].shape[0]

    t_top = _conv_toeplitz(raw["top_w"], raw["top_scale"], Hh, W, Ho, Wo, stride)
    t_bot = _conv_toeplitz(raw["bot_w"], raw["bot_scale"], Hh, W, Ho, Wo, stride)
    return {
        "toeplitz": jnp.stack([t_top, t_bot], axis=0).astype(mxu_dtype),  # (2, Cin*Hh*W, Cout*Ho*Wo)
        "bn_bias": jnp.stack([raw["top_bias"], raw["bot_bias"]],
                             axis=0).reshape(2, Cout, 1).astype(jnp.float32),
        "cc_w": raw["cc_w"].astype(mxu_dtype),                            # (Cout, Cout) [o, c]
        "cc_b": raw["cc_b"].reshape(Cout, 1).astype(jnp.float32),
    }


def init_grid_conv_raw_params(key, in_channels, out_channels):
    """Deterministic synthetic parameters in PyTorch layouts (inference BN
    already reduced to a per-channel scale/bias)."""
    ks = jax.random.split(key, 12)
    eps = 1e-5

    def bn_fold(kg, kb, km, kv, c):
        gamma = 1.0 + 0.1 * jax.random.normal(kg, (c,), jnp.float32)
        beta = 0.1 * jax.random.normal(kb, (c,), jnp.float32)
        mean = 0.1 * jax.random.normal(km, (c,), jnp.float32)
        var = jnp.abs(1.0 + 0.1 * jax.random.normal(kv, (c,), jnp.float32))
        scale = gamma / jnp.sqrt(var + eps)
        return scale, beta - mean * scale

    top_scale, top_bias = bn_fold(ks[4], ks[5], ks[6], ks[7], out_channels)
    bot_scale, bot_bias = bn_fold(ks[8], ks[9], ks[10], ks[11], out_channels)
    return {
        "top_w": 0.1 * jax.random.normal(ks[0], (out_channels, in_channels, 3, 3), jnp.float32),
        "bot_w": 0.1 * jax.random.normal(ks[1], (out_channels, in_channels, 5, 5), jnp.float32),
        "cc_w": 0.1 * jax.random.normal(ks[2], (out_channels, out_channels), jnp.float32),
        "cc_b": 0.1 * jax.random.normal(ks[3], (out_channels,), jnp.float32),
        "top_scale": top_scale, "top_bias": top_bias,
        "bot_scale": bot_scale, "bot_bias": bot_bias,
    }


# ----------------------------------------------------------------------------
# Pure-JAX (XLA) f32 reference for validation
# ----------------------------------------------------------------------------
def grid_conv_reference(x_nchw, raw):
    def branch(x, w, scale, bias, pad):
        y = lax.conv_general_dilated(
            x, w, window_strides=(1, 1), padding=[(pad, pad), (pad, pad)],
            dimension_numbers=("NCHW", "OIHW", "NCHW"))
        y = y * scale[None, :, None, None] + bias[None, :, None, None]
        return y * jax.nn.sigmoid(y)

    split = int(x_nchw.shape[3] // 2)
    top = branch(x_nchw[:, :, :split, :], raw["top_w"], raw["top_scale"], raw["top_bias"], 1)
    bot = branch(x_nchw[:, :, split:, :], raw["bot_w"], raw["bot_scale"], raw["bot_bias"], 2)
    cat = jnp.concatenate([top, bot], axis=2)
    out = lax.conv_general_dilated(
        cat, raw["cc_w"][:, :, None, None], window_strides=(1, 1),
        padding=[(0, 0), (0, 0)], dimension_numbers=("NCHW", "OIHW", "NCHW"))
    return out + raw["cc_b"][None, :, None, None]


if __name__ == "__main__":
    key = jax.random.PRNGKey(0)
    k_x, k_p = jax.random.split(key)

    in_channels, out_channels = 4, 8
    N, H, W = 2, 16, 16
    x = jax.random.normal(k_x, (N, in_channels, H, W), jnp.float32)   # NCHW

    raw = init_grid_conv_raw_params(k_p, in_channels, out_channels)
    params = prepare_grid_conv_params(raw, H, W, stride=1)

    out = grid_conv_forward(x, params, stride=1)
    jax.block_until_ready(out)
    assert out.shape == (N, out_channels, H, W), out.shape

    # Relative-error check (MXU operands are bf16, f32 accumulation).
    ref = grid_conv_reference(x, raw)
    max_err = float(jnp.max(jnp.abs(out - ref)))
    ref_scale = float(jnp.max(jnp.abs(ref)))
    assert max_err / ref_scale < 3e-2, (
        f"mismatch vs reference: max abs err = {max_err}, ref scale = {ref_scale}")

    print("KERNEL_OK")
</pallas_src>

<mosaic_0001>
module attributes {stable_mosaic.version = 11 : i64} {
  func.func @_grid_conv_kernel(%arg0: i32, %arg1: i32, %arg2: memref<2x4x128xf32, #tpu.memory_space<vmem>>, %arg3: memref<1x512x1024xbf16, #tpu.memory_space<vmem>>, %arg4: memref<1x8x1xf32, #tpu.memory_space<vmem>>, %arg5: memref<8x8xbf16, #tpu.memory_space<vmem>>, %arg6: memref<8x1xf32, #tpu.memory_space<vmem>>, %arg7: memref<2x8x128xf32, #tpu.memory_space<vmem>>) attributes {dimension_semantics = [#tpu.dimension_semantics<parallel>, #tpu.dimension_semantics<parallel>], iteration_bounds = array<i64: 2, 1>, scalar_prefetch = 0 : i64, scratch_operands = 0 : i64, tpu.core_type = #tpu.core_type<tc>, window_params = [{transform_indices = @transform_0, window_bounds = array<i64: 2, 4, 128>}, {transform_indices = @transform_1, window_bounds = array<i64: 1, 512, 1024>}, {transform_indices = @transform_2, window_bounds = array<i64: 1, 8, 1>}, {pipeline_mode = #tpu.pipeline_mode<synchronous>, transform_indices = @transform_3, window_bounds = array<i64: 8, 8>}, {pipeline_mode = #tpu.pipeline_mode<synchronous>, transform_indices = @transform_4, window_bounds = array<i64: 8, 1>}, {transform_indices = @transform_5, window_bounds = array<i64: 2, 8, 128>}]} {
    %c0 = arith.constant 0 : index
    %c0_0 = arith.constant 0 : index
    %c0_1 = arith.constant 0 : index
    %0 = vector.load %arg2[%c0, %c0_0, %c0_1] : memref<2x4x128xf32, #tpu.memory_space<vmem>>, vector<2x4x128xf32>
    %1 = arith.truncf %0 : vector<2x4x128xf32> to vector<2x4x128xbf16>
    %2 = vector.shape_cast %1 : vector<2x4x128xbf16> to vector<2x512xbf16>
    %c0_2 = arith.constant 0 : index
    %c0_3 = arith.constant 0 : index
    %c0_4 = arith.constant 0 : index
    %3 = vector.load %arg3[%c0_2, %c0_3, %c0_4] : memref<1x512x1024xbf16, #tpu.memory_space<vmem>>, vector<1x512x1024xbf16>
    %4 = vector.shape_cast %3 : vector<1x512x1024xbf16> to vector<512x1024xbf16>
    %cst = arith.constant dense<0.000000e+00> : vector<2x1024xf32>
    %5 = tpu.matmul %2, %4, %cst {dimension_numbers = #tpu.dot_dimension_numbers<[1], [0], [0], [1], [0, 0, 1, 1], [], []>} : vector<2x512xbf16>, vector<512x1024xbf16>, vector<2x1024xf32> -> vector<2x1024xf32>
    %6 = vector.shape_cast %5 : vector<2x1024xf32> to vector<2x8x128xf32>
    %c0_5 = arith.constant 0 : index
    %c0_6 = arith.constant 0 : index
    %c0_7 = arith.constant 0 : index
    %7 = vector.load %arg4[%c0_5, %c0_6, %c0_7] : memref<1x8x1xf32, #tpu.memory_space<vmem>>, vector<1x8x1xf32>
    %8 = vector.shape_cast %7 : vector<1x8x1xf32> to vector<8x1xf32>
    %9 = vector.shape_cast %8 : vector<8x1xf32> to vector<1x8x1xf32>
    %10 = vector.broadcast %9 : vector<1x8x1xf32> to vector<2x8x128xf32>
    %11 = arith.addf %6, %10 : vector<2x8x128xf32>
    %12 = arith.negf %11 : vector<2x8x128xf32>
    %13 = math.exp %12 : vector<2x8x128xf32>
    %cst_8 = arith.constant 1.000000e+00 : f32
    %14 = vector.broadcast %cst_8 : f32 to vector<2x8x128xf32>
    %15 = arith.addf %14, %13 : vector<2x8x128xf32>
    %16 = arith.divf %14, %15 : vector<2x8x128xf32>
    %17 = arith.mulf %11, %16 : vector<2x8x128xf32>
    %c0_9 = arith.constant 0 : index
    %c0_10 = arith.constant 0 : index
    %18 = vector.load %arg5[%c0_9, %c0_10] : memref<8x8xbf16, #tpu.memory_space<vmem>>, vector<8x8xbf16>
    %c0_11 = arith.constant 0 : index
    %c0_12 = arith.constant 0 : index
    %19 = vector.load %arg6[%c0_11, %c0_12] : memref<8x1xf32, #tpu.memory_space<vmem>>, vector<8x1xf32>
    %20 = arith.truncf %17 : vector<2x8x128xf32> to vector<2x8x128xbf16>
    %21 = vector.extract_strided_slice %20 {offsets = [0, 0, 0], sizes = [1, 8, 128], strides = [1, 1, 1]} : vector<2x8x128xbf16> to vector<1x8x128xbf16>
    %22 = vector.shape_cast %21 : vector<1x8x128xbf16> to vector<8x128xbf16>
    %cst_13 = arith.constant dense<0.000000e+00> : vector<8x128xf32>
    %23 = tpu.matmul %18, %22, %cst_13 {dimension_numbers = #tpu.dot_dimension_numbers<[1], [0], [0], [1], [0, 0, 1, 1], [], []>} : vector<8x8xbf16>, vector<8x128xbf16>, vector<8x128xf32> -> vector<8x128xf32>
    %24 = vector.broadcast %19 : vector<8x1xf32> to vector<8x128xf32>
    %25 = arith.addf %23, %24 : vector<8x128xf32>
    %c0_14 = arith.constant 0 : index
    %c0_15 = arith.constant 0 : index
    %c0_16 = arith.constant 0 : index
    %26 = vector.load %arg7[%c0_14, %c0_15, %c0_16] : memref<2x8x128xf32, #tpu.memory_space<vmem>>, vector<1x8x128xf32>
    %27 = vector.shape_cast %26 : vector<1x8x128xf32> to vector<8x128xf32>
    %28 = vector.shape_cast %25 : vector<8x128xf32> to vector<1x8x128xf32>
    tpu.vector_store %arg7[%c0_14, %c0_15, %c0_16], %28 {strides = array<i32>} : memref<2x8x128xf32, #tpu.memory_space<vmem>>, vector<1x8x128xf32>,
    %29 = vector.extract_strided_slice %20 {offsets = [1, 0, 0], sizes = [1, 8, 128], strides = [1, 1, 1]} : vector<2x8x128xbf16> to vector<1x8x128xbf16>
    %30 = vector.shape_cast %29 : vector<1x8x128xbf16> to vector<8x128xbf16>
    %cst_17 = arith.constant dense<0.000000e+00> : vector<8x128xf32>
    %31 = tpu.matmul %18, %30, %cst_17 {dimension_numbers = #tpu.dot_dimension_numbers<[1], [0], [0], [1], [0, 0, 1, 1], [], []>} : vector<8x8xbf16>, vector<8x128xbf16>, vector<8x128xf32> -> vector<8x128xf32>
    %32 = vector.broadcast %19 : vector<8x1xf32> to vector<8x128xf32>
    %33 = arith.addf %31, %32 : vector<8x128xf32>
    %c1 = arith.constant 1 : index
    %c0_18 = arith.constant 0 : index
    %c0_19 = arith.constant 0 : index
    %34 = vector.load %arg7[%c1, %c0_18, %c0_19] : memref<2x8x128xf32, #tpu.memory_space<vmem>>, vector<1x8x128xf32>
    %35 = vector.shape_cast %34 : vector<1x8x128xf32> to vector<8x128xf32>
    %36 = vector.shape_cast %33 : vector<8x128xf32> to vector<1x8x128xf32>
    tpu.vector_store %arg7[%c1, %c0_18, %c0_19], %36 {strides = array<i32>} : memref<2x8x128xf32, #tpu.memory_space<vmem>>, vector<1x8x128xf32>,
    return
  }
  func.func @transform_0(%arg0: i32, %arg1: i32) -> (i32, i32, i32) {
    %c0_i32 = arith.constant 0 : i32
    %c0_i32_0 = arith.constant 0 : i32
    return %arg1, %c0_i32, %arg0 : i32, i32, i32
  }
  func.func @transform_1(%arg0: i32, %arg1: i32) -> (i32, i32, i32) {
    %c0_i32 = arith.constant 0 : i32
    %c0_i32_0 = arith.constant 0 : i32
    %c0_i32_1 = arith.constant 0 : i32
    return %arg0, %c0_i32, %c0_i32_0 : i32, i32, i32
  }
  func.func @transform_2(%arg0: i32, %arg1: i32) -> (i32, i32, i32) {
    %c0_i32 = arith.constant 0 : i32
    %c0_i32_0 = arith.constant 0 : i32
    %c0_i32_1 = arith.constant 0 : i32
    return %arg0, %c0_i32, %c0_i32_0 : i32, i32, i32
  }
  func.func @transform_3(%arg0: i32, %arg1: i32) -> (i32, i32) {
    %c0_i32 = arith.constant 0 : i32
    %c0_i32_0 = arith.constant 0 : i32
    %c0_i32_1 = arith.constant 0 : i32
    return %c0_i32, %c0_i32_0 : i32, i32
  }
  func.func @transform_4(%arg0: i32, %arg1: i32) -> (i32, i32) {
    %c0_i32 = arith.constant 0 : i32
    %c0_i32_0 = arith.constant 0 : i32
    %c0_i32_1 = arith.constant 0 : i32
    return %c0_i32, %c0_i32_0 : i32, i32
  }
  func.func @transform_5(%arg0: i32, %arg1: i32) -> (i32, i32, i32) {
    %c0_i32 = arith.constant 0 : i32
    %c0_i32_0 = arith.constant 0 : i32
    return %arg1, %c0_i32, %arg0 : i32, i32, i32
  }
}

</mosaic_0001>

<llo_original>
// kernel: grid_conv_forward.1
$region0: #{grid_conv_forward.1}
  #allocation0 [shape = 'u32[]', space=smem, size = 0x4, offset = 0x4, fixed_abs, tag = 'smem constant byte address 0x4 - core index']
  #allocation1 [shape = 'u32[72,128]{1,0:T(1,128)}', space=vmem, size = 0x9000, scoped, tag = 'internal scratch']
  %s0 = inlined_call_operand.vmem [shape: f32[2,4,256], index: 0, kind: input, shape index: {}]
  %s1 = inlined_call_operand.hbm [shape: bf16[2,512,1024], index: 1, kind: input, shape index: {}]
  %s2 = inlined_call_operand.vmem [shape: f32[2,8,1], index: 2, kind: input, shape index: {}]
  %s3 = inlined_call_operand.hbm [shape: bf16[8,8], index: 3, kind: input, shape index: {}]
  %s4 = inlined_call_operand.vmem [shape: f32[8,1], index: 4, kind: input, shape index: {}]
  %s5 = inlined_call_operand.vmem [shape: f32[2,8,256], index: 5, kind: output, shape index: {}]
  %s6 = sld [smem:[#allocation0]]
  $region136: #{grid_conv_forward.1} parent=0
    _
  %s8 = ssub.s32 1, %s6
  %s9 = scalar_select 0, %s8, %s6
  $region1: #{grid_conv_forward.1} parent=0
    #allocation2 [shape = 'u8[8192]{0}', space=vmem, size = 0x2000, scoped, tag = 'input window, operand 0']
    #allocation3 [shape = 'u8[2097152]{0}', space=vmem, size = 0x200000, scoped, tag = 'input window, operand 1']
    #allocation4 [shape = 's32[2]{0}', space=sflag, size = 0x8, scoped, tag = 'scoped memory for grid_conv_forward.1']
    #allocation5 [shape = 'u8[2048]{0}', space=vmem, size = 0x800, scoped, tag = 'input window, operand 3, single buffered']
    #allocation6 [shape = 's32[1]{0}', space=sflag, size = 0x4, scoped, tag = 'scoped memory for grid_conv_forward.1']
    #allocation7 [shape = 'u8[16384]{0}', space=vmem, size = 0x4000, scoped, tag = 'output window, operand 0']
    %10 = vsyncpa [#allocation4], 0
    %s11 = scalar_lea.sflag [#allocation4], 1
    %12 = vsyncpa %s11, 0
    %13 = vsyncpa [#allocation6], 0
    loop: start=0, step=1, limit=4
    $region2: #{grid_conv_forward.1} parent=1 // loop_pre_header
      _
    $region3: #{grid_conv_forward.1} parent=1 // loop_header
      %s15 = sphi 0, %s19
      %p16 = scmp.ge.s32.totalorder %s15, 4
      %s22 = sphi 0, %s34
      %s23 = sphi 0, %s30
      %s24 = sphi 0, %s22
      %s25 = sphi 0, %s23
      %s26 = sphi 0, %s24
      %s27 = sphi 0, %s25
      %s39 = sphi 0, %s41
      %s42 = sphi 0, %s39
      %s43 = sphi 0, %s42
      %s59 = sphi 0, %s43
      %s65 = sphi 0, %s67
      %s68 = sphi 0, %s65
      %s69 = sphi 0, %s68
      %s85 = sphi 0, %s69
      %s91 = sphi 0, %s93
      %s94 = sphi 0, %s91
      %s95 = sphi 0, %s94
      %s111 = sphi 0, %s95
      %s115 = sphi 0, %s115
      %s117 = sphi 0, %s115
      %s118 = sphi 0, %s117
      %s132 = sphi 0, %s118
      %s136 = sphi 0, %s136
      %s138 = sphi 0, %s136
      %s139 = sphi 0, %s138
      %s153 = sphi 0, %s139
      %s161 = sphi 0, %s163
      %s164 = sphi 0, %s161
      %s165 = sphi 0, %s164
      %s181 = sphi 0, %s165
    $region4: #{grid_conv_forward.1} parent=1 // loop_header_branch
      %18 = sbr.rel (%p16) target = $region8
    $region5: #{grid_conv_forward.1} parent=1 // loop_body
      %s20 = ssub.s32 %s15, 1
      %s21 = ssub.s32 %s15, 2
      %s28 = sadd.s32 1, %s23
      %p29 = scmp.ge.s32.totalorder %s28, 1
      %s30 = scalar_select %p29, 0, %s28
      %s31 = sadd.s32 1, %s22
      %s32 = scalar_select %p29, %s31, %s22
      %p33 = scmp.ge.s32.totalorder %s32, 2
      %s34 = scalar_select %p33, 0, %s32
      %s35 = ssub.s32 %s23, %s30
      %s36 = ssub.s32 %s22, %s34
      %s37 = sor.u32 %s35, %s36
      %p38 = scmp.eq.s32.totalorder %s37, 0
      %s40 = sadd.s32 %s39, 1
      %s41 = scalar_select %p38, %s39, %s40
      %p44 = pneg %p38
      %p45 = scmp.eq.s32.totalorder %s15, 1
      %p46 = por %p44, %p45
      %p47 = scmp.ne.s32.totalorder %s39, %s42
      %p48 = scmp.eq.s32.totalorder %s15, 0
      %p49 = por %p47, %p48
      %p50 = scmp.ne.s32.totalorder %s39, %s42
      %p51 = scmp.eq.s32.totalorder %s20, 1
      %p52 = por %p50, %p51
      %p53 = scmp.ne.s32.totalorder %s42, %s43
      %p54 = scmp.eq.s32.totalorder %s20, 0
      %p55 = por %p53, %p54
      %p56 = scmp.ne.s32.totalorder %s42, %s43
      %p57 = scmp.eq.s32.totalorder %s21, 1
      %p58 = por %p56, %p57
      %p60 = scmp.ne.s32.totalorder %s43, %s59
      %p61 = scmp.eq.s32.totalorder %s21, 0
      %p62 = por %p60, %p61
      %s63 = ssub.s32 %s22, %s34
      %p64 = scmp.eq.s32.totalorder %s63, 0
      %s66 = sadd.s32 %s65, 1
      %s67 = scalar_select %p64, %s65, %s66
      %p70 = pneg %p64
      %p71 = scmp.eq.s32.totalorder %s15, 1
      %p72 = por %p70, %p71
      %p73 = scmp.ne.s32.totalorder %s65, %s68
      %p74 = scmp.eq.s32.totalorder %s15, 0
      %p75 = por %p73, %p74
      %p76 = scmp.ne.s32.totalorder %s65, %s68
      %p77 = scmp.eq.s32.totalorder %s20, 1
      %p78 = por %p76, %p77
      %p79 = scmp.ne.s32.totalorder %s68, %s69
      %p80 = scmp.eq.s32.totalorder %s20, 0
      %p81 = por %p79, %p80
      %p82 = scmp.ne.s32.totalorder %s68, %s69
      %p83 = scmp.eq.s32.totalorder %s21, 1
      %p84 = por %p82, %p83
      %p86 = scmp.ne.s32.totalorder %s69, %s85
      %p87 = scmp.eq.s32.totalorder %s21, 0
      %p88 = por %p86, %p87
      %s89 = ssub.s32 %s22, %s34
      %p90 = scmp.eq.s32.totalorder %s89, 0
      %s92 = sadd.s32 %s91, 1
      %s93 = scalar_select %p90, %s91, %s92
      %p96 = pneg %p90
      %p97 = scmp.eq.s32.totalorder %s15, 1
      %p98 = por %p96, %p97
      %p99 = scmp.ne.s32.totalorder %s91, %s94
      %p100 = scmp.eq.s32.totalorder %s15, 0
      %p101 = por %p99, %p100
      %p102 = scmp.ne.s32.totalorder %s91, %s94
      %p103 = scmp.eq.s32.totalorder %s20, 1
      %p104 = por %p102, %p103
      %p105 = scmp.ne.s32.totalorder %s94, %s95
      %p106 = scmp.eq.s32.totalorder %s20, 0
      %p107 = por %p105, %p106
      %p108 = scmp.ne.s32.totalorder %s94, %s95
      %p109 = scmp.eq.s32.totalorder %s21, 1
      %p110 = por %p108, %p109
      %p112 = scmp.ne.s32.totalorder %s95, %s111
      %p113 = scmp.eq.s32.totalorder %s21, 0
      %p114 = por %p112, %p113
      %s116 = sadd.s32 %s115, 1
      %p119 = scmp.eq.s32.totalorder %s15, 1
      %p120 = scmp.ne.s32.totalorder %s115, %s117
      %p121 = scmp.eq.s32.totalorder %s15, 0
      %p122 = por %p120, %p121
      %p123 = scmp.ne.s32.totalorder %s115, %s117
      %p124 = scmp.eq.s32.totalorder %s20, 1
      %p125 = por %p123, %p124
      %p126 = scmp.ne.s32.totalorder %s117, %s118
      %p127 = scmp.eq.s32.totalorder %s20, 0
      %p128 = por %p126, %p127
      %p129 = scmp.ne.s32.totalorder %s117, %s118
      %p130 = scmp.eq.s32.totalorder %s21, 1
      %p131 = por %p129, %p130
      %p133 = scmp.ne.s32.totalorder %s118, %s132
      %p134 = scmp.eq.s32.totalorder %s21, 0
      %p135 = por %p133, %p134
      %s137 = sadd.s32 %s136, 1
      %p140 = scmp.eq.s32.totalorder %s15, 1
      %p141 = scmp.ne.s32.totalorder %s136, %s138
      %p142 = scmp.eq.s32.totalorder %s15, 0
      %p143 = por %p141, %p142
      %p144 = scmp.ne.s32.totalorder %s136, %s138
      %p145 = scmp.eq.s32.totalorder %s20, 1
      %p146 = por %p144, %p145
      %p147 = scmp.ne.s32.totalorder %s138, %s139
      %p148 = scmp.eq.s32.totalorder %s20, 0
      %p149 = por %p147, %p148
      %p150 = scmp.ne.s32.totalorder %s138, %s139
      %p151 = scmp.eq.s32.totalorder %s21, 1
      %p152 = por %p150, %p151
      %p154 = scmp.ne.s32.totalorder %s139, %s153
      %p155 = scmp.eq.s32.totalorder %s21, 0
      %p156 = por %p154, %p155
      %s157 = ssub.s32 %s23, %s30
      %s158 = ssub.s32 %s22, %s34
      %s159 = sor.u32 %s157, %s158
      %p160 = scmp.eq.s32.totalorder %s159, 0
      %s162 = sadd.s32 %s161, 1
      %s163 = scalar_select %p160, %s161, %s162
      %p166 = pneg %p160
      %p167 = scmp.eq.s32.totalorder %s15, 1
      %p168 = por %p166, %p167
      %p169 = scmp.ne.s32.totalorder %s161, %s164
      %p170 = scmp.eq.s32.totalorder %s15, 0
      %p171 = por %p169, %p170
      %p172 = scmp.ne.s32.totalorder %s161, %s164
      %p173 = scmp.eq.s32.totalorder %s20, 1
      %p174 = por %p172, %p173
      %p175 = scmp.ne.s32.totalorder %s164, %s165
      %p176 = scmp.eq.s32.totalorder %s20, 0
      %p177 = por %p175, %p176
      %p178 = scmp.ne.s32.totalorder %s164, %s165
      %p179 = scmp.eq.s32.totalorder %s21, 1
      %p180 = por %p178, %p179
      %p182 = scmp.ne.s32.totalorder %s165, %s181
      %p183 = scmp.eq.s32.totalorder %s21, 0
      %p184 = por %p182, %p183
      %p185 = scmp.le.s32.totalorder 1, %s15
      %p186 = scmp.lt.s32.totalorder %s15, 3
      %p187 = pnand %p185, %p186
      %p188 = pneg %p187
      // Predicated region
      $region9: #{grid_conv_forward.1} parent=5 // pred_check
        _
      $region10: #{grid_conv_forward.1} parent=5 // pred_check_branch
        %190 = sbr.rel (%p187) target = $region12
      $region11: #{grid_conv_forward.1} parent=5 // pred_region
        %s191 = ssub.s32 %s15, 1
        // Predicated region
        $region13: #{grid_conv_forward.1} parent=11 // pred_check
          %p192 = pneg %p128
        $region14: #{grid_conv_forward.1} parent=11 // pred_check_branch
          %194 = sbr.rel (%p192) target = $region16
        $region15: #{grid_conv_forward.1} parent=11 // pred_region
          %196 = vsyncadd [#allocation6], 0
          %s198 = sshll.u32 %s3, 4
          %s199 = int_to_ptr.hbm [resolvable:$true] %s198
          %s200 = sshll.u32 [#allocation5], 4
          %s201 = int_to_ptr.vmem [resolvable:$true] %s200
          %203 = dma.hbm_to_vmem [thread:$0]  %s199, 64, %s201, [#allocation6]
        $region16: #{grid_conv_forward.1} parent=11 // pred_fallthru
          _
        // Predicated region
        $region17: #{grid_conv_forward.1} parent=11 // pred_check
          %p204 = pneg %p149
        $region18: #{grid_conv_forward.1} parent=11 // pred_check_branch
          %206 = sbr.rel (%p204) target = $region20
        $region19: #{grid_conv_forward.1} parent=11 // pred_region
          _
        $region20: #{grid_conv_forward.1} parent=11 // pred_fallthru
          _
      $region12: #{grid_conv_forward.1} parent=5 // pred_fallthru
        _
      %p207 = scmp.lt.s32.totalorder %s15, 2
      // Predicated region
      $region21: #{grid_conv_forward.1} parent=5 // pred_check
        %p208 = pneg %p207
      $region22: #{grid_conv_forward.1} parent=5 // pred_check_branch
        %210 = sbr.rel (%p208) target = $region24
      $region23: #{grid_conv_forward.1} parent=5 // pred_region
        // Predicated region
        $region25: #{grid_conv_forward.1} parent=23 // pred_check
          %p211 = pneg %p49
        $region26: #{grid_conv_forward.1} parent=23 // pred_check_branch
          %213 = sbr.rel (%p211) target = $region28
        $region27: #{grid_conv_forward.1} parent=23 // pred_region
          %s214 = sand.u32 %s39, 1
          %s215 = sand.u32 %s39, 1
          %s216 = smul.addr %s215, 8
          %s217 = scalar_lea.vmem [#allocation2], %s216
          %s218 = smul.u32 2, %s23
          %s219 = smul.addr %s218, 2
          %s220 = sadd.s32 %s22, %s219
          %s221 = smul.addr %s220, 4
          %s222 = scalar_lea.vmem %s0, %s221
          // Predicated region
          $region29: #{grid_conv_forward.1} parent=27 // pred_check
            _
          $region30: #{grid_conv_forward.1} parent=27 // pred_check_branch
            %224 = sbr.rel (0) target = $region32
          $region31: #{grid_conv_forward.1} parent=27 // pred_region
            // Predicated region
            $region33: #{grid_conv_forward.1} parent=31 // pred_check
              _
            $region34: #{grid_conv_forward.1} parent=31 // pred_check_branch
              %226 = sbr.rel target = $region36
            $region35: #{grid_conv_forward.1} parent=31 // pred_region
              // Predicated region
              $region48: #{grid_conv_forward.1} parent=35 // pred_check
                _
              $region49: #{grid_conv_forward.1} parent=35 // pred_check_branch
                %244 = sbr.rel (0) target = $region51
              $region50: #{grid_conv_forward.1} parent=35 // pred_region
                loop: start=0, step=1, limit=1
                $region52: #{grid_conv_forward.1} parent=50 // loop_pre_header
                  _
                $region53: #{grid_conv_forward.1} parent=50 // loop_header
                  %s246 = sphi 0, %s250
                  %p247 = scmp.ge.s32.totalorder %s246, 1
                  %s251 = sphi %s222, %s222
                  %s252 = sphi %s217, %s217
                $region54: #{grid_conv_forward.1} parent=50 // loop_header_branch
                  %249 = sbr.rel (%p247) target = $region58
                $region55: #{grid_conv_forward.1} parent=50 // loop_body
                  _
                $region56: #{grid_conv_forward.1} parent=50 // loop_footer
                  %s250 = sadd.s32 1, %s246
                $region57: #{grid_conv_forward.1} parent=50 // loop_footer_branch
                  %245 = sbr.rel target = $region53
                $region58: #{grid_conv_forward.1} parent=50 // loop_exit
                  _
                %s254 = ssub.s32 16, 1
                loop: start=0, step=1, limit=1
                $region59: #{grid_conv_forward.1} parent=50 // loop_pre_header
                  _
                $region60: #{grid_conv_forward.1} parent=50 // loop_header
                  %s256 = sphi 0, %s260
                  %p257 = scmp.ge.s32.totalorder %s256, 1
                  %s261 = sphi %s222, %s222
                  %s262 = sphi %s217, %s217
                $region61: #{grid_conv_forward.1} parent=50 // loop_header_branch
                  %259 = sbr.rel (%p257) target = $region65
                $region62: #{grid_conv_forward.1} parent=50 // loop_body
                  %v263 = vld [vmem:[%s261] sm:%s254]
                  %264 = vst [vmem:[%s262] sm:%s254] %v263
                  %v265 = vld [vmem:[%s261 + $0x8] sm:%s254]
                  %266 = vst [vmem:[%s262 + $0x4] sm:%s254] %v265
                $region63: #{grid_conv_forward.1} parent=50 // loop_footer
                  %s260 = sadd.s32 1, %s256
                $region64: #{grid_conv_forward.1} parent=50 // loop_footer_branch
                  %255 = sbr.rel target = $region60
                $region65: #{grid_conv_forward.1} parent=50 // loop_exit
                  _
              $region51: #{grid_conv_forward.1} parent=35 // pred_fallthru
                _
            $region36: #{grid_conv_forward.1} parent=31 // pred_fallthru
              _
            // Predicated region
            $region37: #{grid_conv_forward.1} parent=31 // pred_check
              _
            $region38: #{grid_conv_forward.1} parent=31 // pred_check_branch
              %228 = sbr.rel (0) target = $region40
            $region39: #{grid_conv_forward.1} parent=31 // pred_region
              %s230 = ssub.s32 16, 1
              loop: start=0, step=1, limit=1
              $region41: #{grid_conv_forward.1} parent=39 // loop_pre_header
                _
              $region42: #{grid_conv_forward.1} parent=39 // loop_header
                %s232 = sphi 0, %s236
                %p233 = scmp.ge.s32.totalorder %s232, 1
                %s237 = sphi %s222, %s222
                %s238 = sphi %s217, %s217
              $region43: #{grid_conv_forward.1} parent=39 // loop_header_branch
                %235 = sbr.rel (%p233) target = $region47
              $region44: #{grid_conv_forward.1} parent=39 // loop_body
                %v239 = vld [vmem:[%s237] sm:%s230]
                %240 = vst [vmem:[%s238] sm:%s230] %v239
                %v241 = vld [vmem:[%s237 + $0x8] sm:%s230]
                %242 = vst [vmem:[%s238 + $0x4] sm:%s230] %v241
              $region45: #{grid_conv_forward.1} parent=39 // loop_footer
                %s236 = sadd.s32 1, %s232
              $region46: #{grid_conv_forward.1} parent=39 // loop_footer_branch
                %231 = sbr.rel target = $region42
              $region47: #{grid_conv_forward.1} parent=39 // loop_exit
                _
            $region40: #{grid_conv_forward.1} parent=31 // pred_fallthru
              _
          $region32: #{grid_conv_forward.1} parent=27 // pred_fallthru
            _
          %267 = vnop
        $region28: #{grid_conv_forward.1} parent=23 // pred_fallthru
          _
        // Predicated region
        $region66: #{grid_conv_forward.1} parent=23 // pred_check
          %p268 = pneg %p75
        $region67: #{grid_conv_forward.1} parent=23 // pred_check_branch
          %270 = sbr.rel (%p268) target = $region69
        $region68: #{grid_conv_forward.1} parent=23 // pred_region
          %s271 = sand.u32 %s65, 1
          %s272 = scalar_lea.sflag [#allocation4], %s271
          %s273 = sand.u32 %s65, 1
          %s274 = smul.addr %s273, 2048
          %s275 = scalar_lea.vmem [#allocation3], %s274
          %277 = vsyncadd %s272, 0
          %s278 = smul.addr %s22, 512
          %s279 = smul.addr %s278, 4
          %s280 = scalar_lea.hbm %s1, %s279
          %s281 = sshll.u32 %s280, 4
          %s282 = int_to_ptr.hbm [resolvable:$true] %s281
          %s283 = sshll.u32 %s275, 4
          %s284 = int_to_ptr.vmem [resolvable:$true] %s283
          %289 = dma.hbm_to_vmem [thread:$0]  %s282, 32768, %s284, %s272, 512, 512, 32
        $region69: #{grid_conv_forward.1} parent=23 // pred_fallthru
          _
        // Predicated region
        $region70: #{grid_conv_forward.1} parent=23 // pred_check
          %p290 = pneg %p101
        $region71: #{grid_conv_forward.1} parent=23 // pred_check_branch
          %292 = sbr.rel (%p290) target = $region73
        $region72: #{grid_conv_forward.1} parent=23 // pred_region
          %p293 = scmp.lt.s32.totalorder %s22, 1
          %s294 = scalar_select %p293, %s22, 1
          %s295 = smul.addr %s294, 8
          %s296 = scalar_lea.vmem %s2, %s295
        $region73: #{grid_conv_forward.1} parent=23 // pred_fallthru
          _
      $region24: #{grid_conv_forward.1} parent=5 // pred_fallthru
        _
      %p297 = scmp.le.s32.totalorder 1, %s15
      %p298 = scmp.lt.s32.totalorder %s15, 3
      %p299 = pnand %p297, %p298
      %p300 = pneg %p299
      // Predicated region
      $region74: #{grid_conv_forward.1} parent=5 // pred_check
        _
      $region75: #{grid_conv_forward.1} parent=5 // pred_check_branch
        %302 = sbr.rel (%p299) target = $region77
      $region76: #{grid_conv_forward.1} parent=5 // pred_region
        %s303 = ssub.s32 %s15, 1
        %s304 = sand.u32 %s42, 1
        %s305 = sand.u32 %s42, 1
        %s306 = smul.addr %s305, 8
        %s307 = scalar_lea.vmem [#allocation2], %s306
        // Predicated region
        $region78: #{grid_conv_forward.1} parent=76 // pred_check
          %p308 = pneg %p55
        $region79: #{grid_conv_forward.1} parent=76 // pred_check_branch
          %310 = sbr.rel (%p308) target = $region81
        $region80: #{grid_conv_forward.1} parent=76 // pred_region
          _
        $region81: #{grid_conv_forward.1} parent=76 // pred_fallthru
          _
        %s311 = sand.u32 %s68, 1
        %s312 = scalar_lea.sflag [#allocation4], %s311
        %s313 = sand.u32 %s68, 1
        %s314 = smul.addr %s313, 2048
        %s315 = scalar_lea.vmem [#allocation3], %s314
        // Predicated region
        $region82: #{grid_conv_forward.1} parent=76 // pred_check
          %p316 = pneg %p81
        $region83: #{grid_conv_forward.1} parent=76 // pred_check_branch
          %318 = sbr.rel (%p316) target = $region85
        $region84: #{grid_conv_forward.1} parent=76 // pred_region
          %320 = dma.done %s312, 32768
        $region85: #{grid_conv_forward.1} parent=76 // pred_fallthru
          _
        // Predicated region
        $region86: #{grid_conv_forward.1} parent=76 // pred_check
          %p321 = pneg %p128
        $region87: #{grid_conv_forward.1} parent=76 // pred_check_branch
          %323 = sbr.rel (%p321) target = $region89
        $region88: #{grid_conv_forward.1} parent=76 // pred_region
          %325 = dma.done [#allocation6], 64
        $region89: #{grid_conv_forward.1} parent=76 // pred_fallthru
          _
        %s326 = sand.u32 %s42, 1
        %s327 = sand.u32 %s42, 1
        %s328 = smul.addr %s327, 8
        %s329 = scalar_lea.vmem [#allocation2], %s328
        %p330 = pneg %p55
        %p331 = pneg %p52
        %s332 = sand.u32 %s68, 1
        %s333 = scalar_lea.sflag [#allocation4], %s332
        %s334 = sand.u32 %s68, 1
        %s335 = smul.addr %s334, 2048
        %s336 = scalar_lea.vmem [#allocation3], %s335
        %p337 = pneg %p81
        %p338 = pneg %p78
        %p339 = scmp.lt.s32.totalorder %s24, 1
        %s340 = scalar_select %p339, %s24, 1
        %s341 = smul.addr %s340, 8
        %s342 = scalar_lea.vmem %s2, %s341
        %p343 = pneg %p107
        %p344 = pneg %p104
        %p345 = pneg %p128
        %p346 = pneg %p125
        %p347 = pneg %p149
        %p348 = pneg %p146
        %p349 = pneg %p177
        %p350 = pneg %p174
        %s351 = sand.u32 %s164, 1
        %s352 = sand.u32 %s164, 1
        %s353 = smul.addr %s352, 16
        %s354 = scalar_lea.vmem [#allocation7], %s353
        %s355 = smul.u32 2, %s25
        %p356 = scmp.lt.s32.totalorder %s24, 1
        %s357 = scalar_select %p356, %s24, 1
        %s358 = smul.addr %s357, 8
        %s359 = scalar_lea.vmem %s2, %s358
        %s360 = smul.u32 2, %s25
        %v362 = vld [vmem:[%s307] sm:$0xf]
        %v363 = vld [vmem:[%s307 + $0x4] sm:$0xf]
        %v364 = vpack.c.bf16 %v362, %v362
        %v366 = vunpack.c.l.s4 1934713408
        %v367 = vunpack.c.0.s8 %v366
        %v368 = vperm.slane %v364, %v367
        %v369 = vrot.slane %v368, 4
        %vm370 = vcmask 1047556
        %v371 = vsel %vm370, 0, %v369
        %v372 = vpack.c.bf16 %v363, %v363
        %v374 = vunpack.c.l.s4 1934713408
        %v375 = vunpack.c.0.s8 %v374
        %v376 = vperm.slane %v372, %v375
        %v377 = vrot.slane %v376, 4
        %v378 = vsel %vm370, 0, %v377
        %v381 = vpack.i.b16 %v376, %v368
        %v383 = vshrl.u32 %v368, 16
        %v384 = vshrl.u32 %v376, 16
        %v385 = vpack.i.b16 %v384, %v383
        %v389 = vpack.i.b16 %v378, %v371
        %v391 = vshrl.u32 %v371, 16
        %v392 = vshrl.u32 %v378, 16
        %v393 = vpack.i.b16 %v392, %v391
        %v395 = vld [vmem:[%s315] sm:$0xff]
        %v396 = vld [vmem:[%s315 + $0x8] sm:$0xff]
        %v397 = vld [vmem:[%s315 + $0x10] sm:$0xff]
        %v398 = vld [vmem:[%s315 + $0x18] sm:$0xff]
        %v399 = vld [vmem:[%s315 + $0x20] sm:$0xff]
        %v400 = vld [vmem:[%s315 + $0x28] sm:$0xff]
        %v401 = vld [vmem:[%s315 + $0x30] sm:$0xff]
        %v402 = vld [vmem:[%s315 + $0x38] sm:$0xff]
        %v403 = vld [vmem:[%s315 + $0x40] sm:$0xff]
        %v404 = vld [vmem:[%s315 + $0x48] sm:$0xff]
        %v405 = vld [vmem:[%s315 + $0x50] sm:$0xff]
        %v406 = vld [vmem:[%s315 + $0x58] sm:$0xff]
        %v407 = vld [vmem:[%s315 + $0x60] sm:$0xff]
        %v408 = vld [vmem:[%s315 + $0x68] sm:$0xff]
        %v409 = vld [vmem:[%s315 + $0x70] sm:$0xff]
        %v410 = vld [vmem:[%s315 + $0x78] sm:$0xff]
        %v411 = vld [vmem:[%s315 + $0x80] sm:$0xff]
        %v412 = vld [vmem:[%s315 + $0x88] sm:$0xff]
        %v413 = vld [vmem:[%s315 + $0x90] sm:$0xff]
        %v414 = vld [vmem:[%s315 + $0x98] sm:$0xff]
        %v415 = vld [vmem:[%s315 + $0xa0] sm:$0xff]
        %v416 = vld [vmem:[%s315 + $0xa8] sm:$0xff]
        %v417 = vld [vmem:[%s315 + $0xb0] sm:$0xff]
        %v418 = vld [vmem:[%s315 + $0xb8] sm:$0xff]
        %v419 = vld [vmem:[%s315 + $0xc0] sm:$0xff]
        %v420 = vld [vmem:[%s315 + $0xc8] sm:$0xff]
        %v421 = vld [vmem:[%s315 + $0xd0] sm:$0xff]
        %v422 = vld [vmem:[%s315 + $0xd8] sm:$0xff]
        %v423 = vld [vmem:[%s315 + $0xe0] sm:$0xff]
        %v424 = vld [vmem:[%s315 + $0xe8] sm:$0xff]
        %v425 = vld [vmem:[%s315 + $0xf0] sm:$0xff]
        %v426 = vld [vmem:[%s315 + $0xf8] sm:$0xff]
        %v427 = vld [vmem:[%s315 + $0x100] sm:$0xff]
        %v428 = vld [vmem:[%s315 + $0x108] sm:$0xff]
        %v429 = vld [vmem:[%s315 + $0x110] sm:$0xff]
        %v430 = vld [vmem:[%s315 + $0x118] sm:$0xff]
        %v431 = vld [vmem:[%s315 + $0x120] sm:$0xff]
        %v432 = vld [vmem:[%s315 + $0x128] sm:$0xff]
        %v433 = vld [vmem:[%s315 + $0x130] sm:$0xff]
        %v434 = vld [vmem:[%s315 + $0x138] sm:$0xff]
        %v435 = vld [vmem:[%s315 + $0x140] sm:$0xff]
        %v436 = vld [vmem:[%s315 + $0x148] sm:$0xff]
        %v437 = vld [vmem:[%s315 + $0x150] sm:$0xff]
        %v438 = vld [vmem:[%s315 + $0x158] sm:$0xff]
        %v439 = vld [vmem:[%s315 + $0x160] sm:$0xff]
        %v440 = vld [vmem:[%s315 + $0x168] sm:$0xff]
        %v441 = vld [vmem:[%s315 + $0x170] sm:$0xff]
        %v442 = vld [vmem:[%s315 + $0x178] sm:$0xff]
        %v443 = vld [vmem:[%s315 + $0x180] sm:$0xff]
        %v444 = vld [vmem:[%s315 + $0x188] sm:$0xff]
        %v445 = vld [vmem:[%s315 + $0x190] sm:$0xff]
        %v446 = vld [vmem:[%s315 + $0x198] sm:$0xff]
        %v447 = vld [vmem:[%s315 + $0x1a0] sm:$0xff]
        %v448 = vld [vmem:[%s315 + $0x1a8] sm:$0xff]
        %v449 = vld [vmem:[%s315 + $0x1b0] sm:$0xff]
        %v450 = vld [vmem:[%s315 + $0x1b8] sm:$0xff]
        %v451 = vld [vmem:[%s315 + $0x1c0] sm:$0xff]
        %v452 = vld [vmem:[%s315 + $0x1c8] sm:$0xff]
        %v453 = vld [vmem:[%s315 + $0x1d0] sm:$0xff]
        %v454 = vld [vmem:[%s315 + $0x1d8] sm:$0xff]
        %v455 = vld [vmem:[%s315 + $0x1e0] sm:$0xff]
        %v456 = vld [vmem:[%s315 + $0x1e8] sm:$0xff]
        %v457 = vld [vmem:[%s315 + $0x1f0] sm:$0xff]
        %v458 = vld [vmem:[%s315 + $0x1f8] sm:$0xff]
        %v459 = vld [vmem:[%s315 + $0x200] sm:$0xff]
        %v460 = vld [vmem:[%s315 + $0x208] sm:$0xff]
        %v461 = vld [vmem:[%s315 + $0x210] sm:$0xff]
        %v462 = vld [vmem:[%s315 + $0x218] sm:$0xff]
        %v463 = vld [vmem:[%s315 + $0x220] sm:$0xff]
        %v464 = vld [vmem:[%s315 + $0x228] sm:$0xff]
        %v465 = vld [vmem:[%s315 + $0x230] sm:$0xff]
        %v466 = vld [vmem:[%s315 + $0x238] sm:$0xff]
        %v467 = vld [vmem:[%s315 + $0x240] sm:$0xff]
        %v468 = vld [vmem:[%s315 + $0x248] sm:$0xff]
        %v469 = vld [vmem:[%s315 + $0x250] sm:$0xff]
        %v470 = vld [vmem:[%s315 + $0x258] sm:$0xff]
        %v471 = vld [vmem:[%s315 + $0x260] sm:$0xff]
        %v472 = vld [vmem:[%s315 + $0x268] sm:$0xff]
        %v473 = vld [vmem:[%s315 + $0x270] sm:$0xff]
        %v474 = vld [vmem:[%s315 + $0x278] sm:$0xff]
        %v475 = vld [vmem:[%s315 + $0x280] sm:$0xff]
        %v476 = vld [vmem:[%s315 + $0x288] sm:$0xff]
        %v477 = vld [vmem:[%s315 + $0x290] sm:$0xff]
        %v478 = vld [vmem:[%s315 + $0x298] sm:$0xff]
        %v479 = vld [vmem:[%s315 + $0x2a0] sm:$0xff]
        %v480 = vld [vmem:[%s315 + $0x2a8] sm:$0xff]
        %v481 = vld [vmem:[%s315 + $0x2b0] sm:$0xff]
        %v482 = vld [vmem:[%s315 + $0x2b8] sm:$0xff]
        %v483 = vld [vmem:[%s315 + $0x2c0] sm:$0xff]
        %v484 = vld [vmem:[%s315 + $0x2c8] sm:$0xff]
        %v485 = vld [vmem:[%s315 + $0x2d0] sm:$0xff]
        %v486 = vld [vmem:[%s315 + $0x2d8] sm:$0xff]
        %v487 = vld [vmem:[%s315 + $0x2e0] sm:$0xff]
        %v488 = vld [vmem:[%s315 + $0x2e8] sm:$0xff]
        %v489 = vld [vmem:[%s315 + $0x2f0] sm:$0xff]
        %v490 = vld [vmem:[%s315 + $0x2f8] sm:$0xff]
        %v491 = vld [vmem:[%s315 + $0x300] sm:$0xff]
        %v492 = vld [vmem:[%s315 + $0x308] sm:$0xff]
        %v493 = vld [vmem:[%s315 + $0x310] sm:$0xff]
        %v494 = vld [vmem:[%s315 + $0x318] sm:$0xff]
        %v495 = vld [vmem:[%s315 + $0x320] sm:$0xff]
        %v496 = vld [vmem:[%s315 + $0x328] sm:$0xff]
        %v497 = vld [vmem:[%s315 + $0x330] sm:$0xff]
        %v498 = vld [vmem:[%s315 + $0x338] sm:$0xff]
        %v499 = vld [vmem:[%s315 + $0x340] sm:$0xff]
        %v500 = vld [vmem:[%s315 + $0x348] sm:$0xff]
        %v501 = vld [vmem:[%s315 + $0x350] sm:$0xff]
        %v502 = vld [vmem:[%s315 + $0x358] sm:$0xff]
        %v503 = vld [vmem:[%s315 + $0x360] sm:$0xff]
        %v504 = vld [vmem:[%s315 + $0x368] sm:$0xff]
        %v505 = vld [vmem:[%s315 + $0x370] sm:$0xff]
        %v506 = vld [vmem:[%s315 + $0x378] sm:$0xff]
        %v507 = vld [vmem:[%s315 + $0x380] sm:$0xff]
        %v508 = vld [vmem:[%s315 + $0x388] sm:$0xff]
        %v509 = vld [vmem:[%s315 + $0x390] sm:$0xff]
        %v510 = vld [vmem:[%s315 + $0x398] sm:$0xff]
        %v511 = vld [vmem:[%s315 + $0x3a0] sm:$0xff]
        %v512 = vld [vmem:[%s315 + $0x3a8] sm:$0xff]
        %v513 = vld [vmem:[%s315 + $0x3b0] sm:$0xff]
        %v514 = vld [vmem:[%s315 + $0x3b8] sm:$0xff]
        %v515 = vld [vmem:[%s315 + $0x3c0] sm:$0xff]
        %v516 = vld [vmem:[%s315 + $0x3c8] sm:$0xff]
        %v517 = vld [vmem:[%s315 + $0x3d0] sm:$0xff]
        %v518 = vld [vmem:[%s315 + $0x3d8] sm:$0xff]
        %v519 = vld [vmem:[%s315 + $0x3e0] sm:$0xff]
        %v520 = vld [vmem:[%s315 + $0x3e8] sm:$0xff]
        %v521 = vld [vmem:[%s315 + $0x3f0] sm:$0xff]
        %v522 = vld [vmem:[%s315 + $0x3f8] sm:$0xff]
        %v523 = vld [vmem:[%s315 + $0x400] sm:$0xff]
        %v524 = vld [vmem:[%s315 + $0x408] sm:$0xff]
        %v525 = vld [vmem:[%s315 + $0x410] sm:$0xff]
        %v526 = vld [vmem:[%s315 + $0x418] sm:$0xff]
        %v527 = vld [vmem:[%s315 + $0x420] sm:$0xff]
        %v528 = vld [vmem:[%s315 + $0x428] sm:$0xff]
        %v529 = vld [vmem:[%s315 + $0x430] sm:$0xff]
        %v530 = vld [vmem:[%s315 + $0x438] sm:$0xff]
        %v531 = vld [vmem:[%s315 + $0x440] sm:$0xff]
        %v532 = vld [vmem:[%s315 + $0x448] sm:$0xff]
        %v533 = vld [vmem:[%s315 + $0x450] sm:$0xff]
        %v534 = vld [vmem:[%s315 + $0x458] sm:$0xff]
        %v535 = vld [vmem:[%s315 + $0x460] sm:$0xff]
        %v536 = vld [vmem:[%s315 + $0x468] sm:$0xff]
        %v537 = vld [vmem:[%s315 + $0x470] sm:$0xff]
        %v538 = vld [vmem:[%s315 + $0x478] sm:$0xff]
        %v539 = vld [vmem:[%s315 + $0x480] sm:$0xff]
        %v540 = vld [vmem:[%s315 + $0x488] sm:$0xff]
        %v541 = vld [vmem:[%s315 + $0x490] sm:$0xff]
        %v542 = vld [vmem:[%s315 + $0x498] sm:$0xff]
        %v543 = vld [vmem:[%s315 + $0x4a0] sm:$0xff]
        %v544 = vld [vmem:[%s315 + $0x4a8] sm:$0xff]
        %v545 = vld [vmem:[%s315 + $0x4b0] sm:$0xff]
        %v546 = vld [vmem:[%s315 + $0x4b8] sm:$0xff]
        %v547 = vld [vmem:[%s315 + $0x4c0] sm:$0xff]
        %v548 = vld [vmem:[%s315 + $0x4c8] sm:$0xff]
        %v549 = vld [vmem:[%s315 + $0x4d0] sm:$0xff]
        %v550 = vld [vmem:[%s315 + $0x4d8] sm:$0xff]
        %v551 = vld [vmem:[%s315 + $0x4e0] sm:$0xff]
        %v552 = vld [vmem:[%s315 + $0x4e8] sm:$0xff]
        %v553 = vld [vmem:[%s315 + $0x4f0] sm:$0xff]
        %v554 = vld [vmem:[%s315 + $0x4f8] sm:$0xff]
        %v555 = vld [vmem:[%s315 + $0x500] sm:$0xff]
        %v556 = vld [vmem:[%s315 + $0x508] sm:$0xff]
        %v557 = vld [vmem:[%s315 + $0x510] sm:$0xff]
        %v558 = vld [vmem:[%s315 + $0x518] sm:$0xff]
        %v559 = vld [vmem:[%s315 + $0x520] sm:$0xff]
        %v560 = vld [vmem:[%s315 + $0x528] sm:$0xff]
        %v561 = vld [vmem:[%s315 + $0x530] sm:$0xff]
        %v562 = vld [vmem:[%s315 + $0x538] sm:$0xff]
        %v563 = vld [vmem:[%s315 + $0x540] sm:$0xff]
        %v564 = vld [vmem:[%s315 + $0x548] sm:$0xff]
        %v565 = vld [vmem:[%s315 + $0x550] sm:$0xff]
        %v566 = vld [vmem:[%s315 + $0x558] sm:$0xff]
        %v567 = vld [vmem:[%s315 + $0x560] sm:$0xff]
        %v568 = vld [vmem:[%s315 + $0x568] sm:$0xff]
        %v569 = vld [vmem:[%s315 + $0x570] sm:$0xff]
        %v570 = vld [vmem:[%s315 + $0x578] sm:$0xff]
        %v571 = vld [vmem:[%s315 + $0x580] sm:$0xff]
        %v572 = vld [vmem:[%s315 + $0x588] sm:$0xff]
        %v573 = vld [vmem:[%s315 + $0x590] sm:$0xff]
        %v574 = vld [vmem:[%s315 + $0x598] sm:$0xff]
        %v575 = vld [vmem:[%s315 + $0x5a0] sm:$0xff]
        %v576 = vld [vmem:[%s315 + $0x5a8] sm:$0xff]
        %v577 = vld [vmem:[%s315 + $0x5b0] sm:$0xff]
        %v578 = vld [vmem:[%s315 + $0x5b8] sm:$0xff]
        %v579 = vld [vmem:[%s315 + $0x5c0] sm:$0xff]
        %v580 = vld [vmem:[%s315 + $0x5c8] sm:$0xff]
        %v581 = vld [vmem:[%s315 + $0x5d0] sm:$0xff]
        %v582 = vld [vmem:[%s315 + $0x5d8] sm:$0xff]
        %v583 = vld [vmem:[%s315 + $0x5e0] sm:$0xff]
        %v584 = vld [vmem:[%s315 + $0x5e8] sm:$0xff]
        %v585 = vld [vmem:[%s315 + $0x5f0] sm:$0xff]
        %v586 = vld [vmem:[%s315 + $0x5f8] sm:$0xff]
        %v587 = vld [vmem:[%s315 + $0x600] sm:$0xff]
        %v588 = vld [vmem:[%s315 + $0x608] sm:$0xff]
        %v589 = vld [vmem:[%s315 + $0x610] sm:$0xff]
        %v590 = vld [vmem:[%s315 + $0x618] sm:$0xff]
        %v591 = vld [vmem:[%s315 + $0x620] sm:$0xff]
        %v592 = vld [vmem:[%s315 + $0x628] sm:$0xff]
        %v593 = vld [vmem:[%s315 + $0x630] sm:$0xff]
        %v594 = vld [vmem:[%s315 + $0x638] sm:$0xff]
        %v595 = vld [vmem:[%s315 + $0x640] sm:$0xff]
        %v596 = vld [vmem:[%s315 + $0x648] sm:$0xff]
        %v597 = vld [vmem:[%s315 + $0x650] sm:$0xff]
        %v598 = vld [vmem:[%s315 + $0x658] sm:$0xff]
        %v599 = vld [vmem:[%s315 + $0x660] sm:$0xff]
        %v600 = vld [vmem:[%s315 + $0x668] sm:$0xff]
        %v601 = vld [vmem:[%s315 + $0x670] sm:$0xff]
        %v602 = vld [vmem:[%s315 + $0x678] sm:$0xff]
        %v603 = vld [vmem:[%s315 + $0x680] sm:$0xff]
        %v604 = vld [vmem:[%s315 + $0x688] sm:$0xff]
        %v605 = vld [vmem:[%s315 + $0x690] sm:$0xff]
        %v606 = vld [vmem:[%s315 + $0x698] sm:$0xff]
        %v607 = vld [vmem:[%s315 + $0x6a0] sm:$0xff]
        %v608 = vld [vmem:[%s315 + $0x6a8] sm:$0xff]
        %v609 = vld [vmem:[%s315 + $0x6b0] sm:$0xff]
        %v610 = vld [vmem:[%s315 + $0x6b8] sm:$0xff]
        %v611 = vld [vmem:[%s315 + $0x6c0] sm:$0xff]
        %v612 = vld [vmem:[%s315 + $0x6c8] sm:$0xff]
        %v613 = vld [vmem:[%s315 + $0x6d0] sm:$0xff]
        %v614 = vld [vmem:[%s315 + $0x6d8] sm:$0xff]
        %v615 = vld [vmem:[%s315 + $0x6e0] sm:$0xff]
        %v616 = vld [vmem:[%s315 + $0x6e8] sm:$0xff]
        %v617 = vld [vmem:[%s315 + $0x6f0] sm:$0xff]
        %v618 = vld [vmem:[%s315 + $0x6f8] sm:$0xff]
        %v619 = vld [vmem:[%s315 + $0x700] sm:$0xff]
        %v620 = vld [vmem:[%s315 + $0x708] sm:$0xff]
        %v621 = vld [vmem:[%s315 + $0x710] sm:$0xff]
        %v622 = vld [vmem:[%s315 + $0x718] sm:$0xff]
        %v623 = vld [vmem:[%s315 + $0x720] sm:$0xff]
        %v624 = vld [vmem:[%s315 + $0x728] sm:$0xff]
        %v625 = vld [vmem:[%s315 + $0x730] sm:$0xff]
        %v626 = vld [vmem:[%s315 + $0x738] sm:$0xff]
        %v627 = vld [vmem:[%s315 + $0x740] sm:$0xff]
        %v628 = vld [vmem:[%s315 + $0x748] sm:$0xff]
        %v629 = vld [vmem:[%s315 + $0x750] sm:$0xff]
        %v630 = vld [vmem:[%s315 + $0x758] sm:$0xff]
        %v631 = vld [vmem:[%s315 + $0x760] sm:$0xff]
        %v632 = vld [vmem:[%s315 + $0x768] sm:$0xff]
        %v633 = vld [vmem:[%s315 + $0x770] sm:$0xff]
        %v634 = vld [vmem:[%s315 + $0x778] sm:$0xff]
        %v635 = vld [vmem:[%s315 + $0x780] sm:$0xff]
        %v636 = vld [vmem:[%s315 + $0x788] sm:$0xff]
        %v637 = vld [vmem:[%s315 + $0x790] sm:$0xff]
        %v638 = vld [vmem:[%s315 + $0x798] sm:$0xff]
        %v639 = vld [vmem:[%s315 + $0x7a0] sm:$0xff]
        %v640 = vld [vmem:[%s315 + $0x7a8] sm:$0xff]
        %v641 = vld [vmem:[%s315 + $0x7b0] sm:$0xff]
        %v642 = vld [vmem:[%s315 + $0x7b8] sm:$0xff]
        %v643 = vld [vmem:[%s315 + $0x7c0] sm:$0xff]
        %v644 = vld [vmem:[%s315 + $0x7c8] sm:$0xff]
        %v645 = vld [vmem:[%s315 + $0x7d0] sm:$0xff]
        %v646 = vld [vmem:[%s315 + $0x7d8] sm:$0xff]
        %v647 = vld [vmem:[%s315 + $0x7e0] sm:$0xff]
        %v648 = vld [vmem:[%s315 + $0x7e8] sm:$0xff]
        %v649 = vld [vmem:[%s315 + $0x7f0] sm:$0xff]
        %v650 = vld [vmem:[%s315 + $0x7f8] sm:$0xff]
        %v907 = vunpack.c.l.b16 %v395
        %v908 = vunpack.c.h.b16 %v395
        %v909 = vunpack.c.l.b16 %v396
        %v910 = vunpack.c.h.b16 %v396
        %v911 = vunpack.c.l.b16 %v397
        %v912 = vunpack.c.h.b16 %v397
        %v913 = vunpack.c.l.b16 %v398
        %v914 = vunpack.c.h.b16 %v398
        %v915 = vunpack.c.l.b16 %v399
        %v916 = vunpack.c.h.b16 %v399
        %v917 = vunpack.c.l.b16 %v400
        %v918 = vunpack.c.h.b16 %v400
        %v919 = vunpack.c.l.b16 %v401
        %v920 = vunpack.c.h.b16 %v401
        %v921 = vunpack.c.l.b16 %v402
        %v922 = vunpack.c.h.b16 %v402
        %v923 = vunpack.c.l.b16 %v403
        %v924 = vunpack.c.h.b16 %v403
        %v925 = vunpack.c.l.b16 %v404
        %v926 = vunpack.c.h.b16 %v404
        %v927 = vunpack.c.l.b16 %v405
        %v928 = vunpack.c.h.b16 %v405
        %v929 = vunpack.c.l.b16 %v406
        %v930 = vunpack.c.h.b16 %v406
        %v931 = vunpack.c.l.b16 %v407
        %v932 = vunpack.c.h.b16 %v407
        %v933 = vunpack.c.l.b16 %v408
        %v934 = vunpack.c.h.b16 %v408
        %v935 = vunpack.c.l.b16 %v409
        %v936 = vunpack.c.h.b16 %v409
        %v937 = vunpack.c.l.b16 %v410
        %v938 = vunpack.c.h.b16 %v410
        %v939 = vunpack.c.l.b16 %v411
        %v940 = vunpack.c.h.b16 %v411
        %v941 = vunpack.c.l.b16 %v412
        %v942 = vunpack.c.h.b16 %v412
        %v943 = vunpack.c.l.b16 %v413
        %v944 = vunpack.c.h.b16 %v413
        %v945 = vunpack.c.l.b16 %v414
        %v946 = vunpack.c.h.b16 %v414
        %v947 = vunpack.c.l.b16 %v415
        %v948 = vunpack.c.h.b16 %v415
        %v949 = vunpack.c.l.b16 %v416
        %v950 = vunpack.c.h.b16 %v416
        %v951 = vunpack.c.l.b16 %v417
        %v952 = vunpack.c.h.b16 %v417
        %v953 = vunpack.c.l.b16 %v418
        %v954 = vunpack.c.h.b16 %v418
        %v955 = vunpack.c.l.b16 %v419
        %v956 = vunpack.c.h.b16 %v419
        %v957 = vunpack.c.l.b16 %v420
        %v958 = vunpack.c.h.b16 %v420
        %v959 = vunpack.c.l.b16 %v421
        %v960 = vunpack.c.h.b16 %v421
        %v961 = vunpack.c.l.b16 %v422
        %v962 = vunpack.c.h.b16 %v422
        %v963 = vunpack.c.l.b16 %v423
        %v964 = vunpack.c.h.b16 %v423
        %v965 = vunpack.c.l.b16 %v424
        %v966 = vunpack.c.h.b16 %v424
        %v967 = vunpack.c.l.b16 %v425
        %v968 = vunpack.c.h.b16 %v425
        %v969 = vunpack.c.l.b16 %v426
        %v970 = vunpack.c.h.b16 %v426
        %v971 = vunpack.c.l.b16 %v427
        %v972 = vunpack.c.h.b16 %v427
        %v973 = vunpack.c.l.b16 %v428
        %v974 = vunpack.c.h.b16 %v428
        %v975 = vunpack.c.l.b16 %v429
        %v976 = vunpack.c.h.b16 %v429
        %v977 = vunpack.c.l.b16 %v430
        %v978 = vunpack.c.h.b16 %v430
        %v979 = vunpack.c.l.b16 %v431
        %v980 = vunpack.c.h.b16 %v431
        %v981 = vunpack.c.l.b16 %v432
        %v982 = vunpack.c.h.b16 %v432
        %v983 = vunpack.c.l.b16 %v433
        %v984 = vunpack.c.h.b16 %v433
        %v985 = vunpack.c.l.b16 %v434
        %v986 = vunpack.c.h.b16 %v434
        %v987 = vunpack.c.l.b16 %v435
        %v988 = vunpack.c.h.b16 %v435
        %v989 = vunpack.c.l.b16 %v436
        %v990 = vunpack.c.h.b16 %v436
        %v991 = vunpack.c.l.b16 %v437
        %v992 = vunpack.c.h.b16 %v437
        %v993 = vunpack.c.l.b16 %v438
        %v994 = vunpack.c.h.b16 %v438
        %v995 = vunpack.c.l.b16 %v439
        %v996 = vunpack.c.h.b16 %v439
        %v997 = vunpack.c.l.b16 %v440
        %v998 = vunpack.c.h.b16 %v440
        %v999 = vunpack.c.l.b16 %v441
        %v1000 = vunpack.c.h.b16 %v441
        %v1001 = vunpack.c.l.b16 %v442
        %v1002 = vunpack.c.h.b16 %v442
        %v1003 = vunpack.c.l.b16 %v443
        %v1004 = vunpack.c.h.b16 %v443
        %v1005 = vunpack.c.l.b16 %v444
        %v1006 = vunpack.c.h.b16 %v444
        %v1007 = vunpack.c.l.b16 %v445
        %v1008 = vunpack.c.h.b16 %v445
        %v1009 = vunpack.c.l.b16 %v446
        %v1010 = vunpack.c.h.b16 %v446
        %v1011 = vunpack.c.l.b16 %v447
        %v1012 = vunpack.c.h.b16 %v447
        %v1013 = vunpack.c.l.b16 %v448
        %v1014 = vunpack.c.h.b16 %v448
        %v1015 = vunpack.c.l.b16 %v449
        %v1016 = vunpack.c.h.b16 %v449
        %v1017 = vunpack.c.l.b16 %v450
        %v1018 = vunpack.c.h.b16 %v450
        %v1019 = vunpack.c.l.b16 %v451
        %v1020 = vunpack.c.h.b16 %v451
        %v1021 = vunpack.c.l.b16 %v452
        %v1022 = vunpack.c.h.b16 %v452
        %v1023 = vunpack.c.l.b16 %v453
        %v1024 = vunpack.c.h.b16 %v453
        %v1025 = vunpack.c.l.b16 %v454
        %v1026 = vunpack.c.h.b16 %v454
        %v1027 = vunpack.c.l.b16 %v455
        %v1028 = vunpack.c.h.b16 %v455
        %v1029 = vunpack.c.l.b16 %v456
        %v1030 = vunpack.c.h.b16 %v456
        %v1031 = vunpack.c.l.b16 %v457
        %v1032 = vunpack.c.h.b16 %v457
        %v1033 = vunpack.c.l.b16 %v458
        %v1034 = vunpack.c.h.b16 %v458
        %v1035 = vunpack.c.l.b16 %v459
        %v1036 = vunpack.c.h.b16 %v459
        %v1037 = vunpack.c.l.b16 %v460
        %v1038 = vunpack.c.h.b16 %v460
        %v1039 = vunpack.c.l.b16 %v461
        %v1040 = vunpack.c.h.b16 %v461
        %v1041 = vunpack.c.l.b16 %v462
        %v1042 = vunpack.c.h.b16 %v462
        %v1043 = vunpack.c.l.b16 %v463
        %v1044 = vunpack.c.h.b16 %v463
        %v1045 = vunpack.c.l.b16 %v464
        %v1046 = vunpack.c.h.b16 %v464
        %v1047 = vunpack.c.l.b16 %v465
        %v1048 = vunpack.c.h.b16 %v465
        %v1049 = vunpack.c.l.b16 %v466
        %v1050 = vunpack.c.h.b16 %v466
        %v1051 = vunpack.c.l.b16 %v467
        %v1052 = vunpack.c.h.b16 %v467
        %v1053 = vunpack.c.l.b16 %v468
        %v1054 = vunpack.c.h.b16 %v468
        %v1055 = vunpack.c.l.b16 %v469
        %v1056 = vunpack.c.h.b16 %v469
        %v1057 = vunpack.c.l.b16 %v470
        %v1058 = vunpack.c.h.b16 %v470
        %v1059 = vunpack.c.l.b16 %v471
        %v1060 = vunpack.c.h.b16 %v471
        %v1061 = vunpack.c.l.b16 %v472
        %v1062 = vunpack.c.h.b16 %v472
        %v1063 = vunpack.c.l.b16 %v473
        %v1064 = vunpack.c.h.b16 %v473
        %v1065 = vunpack.c.l.b16 %v474
        %v1066 = vunpack.c.h.b16 %v474
        %v1067 = vunpack.c.l.b16 %v475
        %v1068 = vunpack.c.h.b16 %v475
        %v1069 = vunpack.c.l.b16 %v476
        %v1070 = vunpack.c.h.b16 %v476
        %v1071 = vunpack.c.l.b16 %v477
        %v1072 = vunpack.c.h.b16 %v477
        %v1073 = vunpack.c.l.b16 %v478
        %v1074 = vunpack.c.h.b16 %v478
        %v1075 = vunpack.c.l.b16 %v479
        %v1076 = vunpack.c.h.b16 %v479
        %v1077 = vunpack.c.l.b16 %v480
        %v1078 = vunpack.c.h.b16 %v480
        %v1079 = vunpack.c.l.b16 %v481
        %v1080 = vunpack.c.h.b16 %v481
        %v1081 = vunpack.c.l.b16 %v482
        %v1082 = vunpack.c.h.b16 %v482
        %v1083 = vunpack.c.l.b16 %v483
        %v1084 = vunpack.c.h.b16 %v483
        %v1085 = vunpack.c.l.b16 %v484
        %v1086 = vunpack.c.h.b16 %v484
        %v1087 = vunpack.c.l.b16 %v485
        %v1088 = vunpack.c.h.b16 %v485
        %v1089 = vunpack.c.l.b16 %v486
        %v1090 = vunpack.c.h.b16 %v486
        %v1091 = vunpack.c.l.b16 %v487
        %v1092 = vunpack.c.h.b16 %v487
        %v1093 = vunpack.c.l.b16 %v488
        %v1094 = vunpack.c.h.b16 %v488
        %v1095 = vunpack.c.l.b16 %v489
        %v1096 = vunpack.c.h.b16 %v489
        %v1097 = vunpack.c.l.b16 %v490
        %v1098 = vunpack.c.h.b16 %v490
        %v1099 = vunpack.c.l.b16 %v491
        %v1100 = vunpack.c.h.b16 %v491
        %v1101 = vunpack.c.l.b16 %v492
        %v1102 = vunpack.c.h.b16 %v492
        %v1103 = vunpack.c.l.b16 %v493
        %v1104 = vunpack.c.h.b16 %v493
        %v1105 = vunpack.c.l.b16 %v494
        %v1106 = vunpack.c.h.b16 %v494
        %v1107 = vunpack.c.l.b16 %v495
        %v1108 = vunpack.c.h.b16 %v495
        %v1109 = vunpack.c.l.b16 %v496
        %v1110 = vunpack.c.h.b16 %v496
        %v1111 = vunpack.c.l.b16 %v497
        %v1112 = vunpack.c.h.b16 %v497
        %v1113 = vunpack.c.l.b16 %v498
        %v1114 = vunpack.c.h.b16 %v498
        %v1115 = vunpack.c.l.b16 %v499
        %v1116 = vunpack.c.h.b16 %v499
        %v1117 = vunpack.c.l.b16 %v500
        %v1118 = vunpack.c.h.b16 %v500
        %v1119 = vunpack.c.l.b16 %v501
        %v1120 = vunpack.c.h.b16 %v501
        %v1121 = vunpack.c.l.b16 %v502
        %v1122 = vunpack.c.h.b16 %v502
        %v1123 = vunpack.c.l.b16 %v503
        %v1124 = vunpack.c.h.b16 %v503
        %v1125 = vunpack.c.l.b16 %v504
        %v1126 = vunpack.c.h.b16 %v504
        %v1127 = vunpack.c.l.b16 %v505
        %v1128 = vunpack.c.h.b16 %v505
        %v1129 = vunpack.c.l.b16 %v506
        %v1130 = vunpack.c.h.b16 %v506
        %v1131 = vunpack.c.l.b16 %v507
        %v1132 = vunpack.c.h.b16 %v507
        %v1133 = vunpack.c.l.b16 %v508
        %v1134 = vunpack.c.h.b16 %v508
        %v1135 = vunpack.c.l.b16 %v509
        %v1136 = vunpack.c.h.b16 %v509
        %v1137 = vunpack.c.l.b16 %v510
        %v1138 = vunpack.c.h.b16 %v510
        %v1139 = vunpack.c.l.b16 %v511
        %v1140 = vunpack.c.h.b16 %v511
        %v1141 = vunpack.c.l.b16 %v512
        %v1142 = vunpack.c.h.b16 %v512
        %v1143 = vunpack.c.l.b16 %v513
        %v1144 = vunpack.c.h.b16 %v513
        %v1145 = vunpack.c.l.b16 %v514
        %v1146 = vunpack.c.h.b16 %v514
        %v1147 = vunpack.c.l.b16 %v515
        %v1148 = vunpack.c.h.b16 %v515
        %v1149 = vunpack.c.l.b16 %v516
        %v1150 = vunpack.c.h.b16 %v516
        %v1151 = vunpack.c.l.b16 %v517
        %v1152 = vunpack.c.h.b16 %v517
        %v1153 = vunpack.c.l.b16 %v518
        %v1154 = vunpack.c.h.b16 %v518
        %v1155 = vunpack.c.l.b16 %v519
        %v1156 = vunpack.c.h.b16 %v519
        %v1157 = vunpack.c.l.b16 %v520
        %v1158 = vunpack.c.h.b16 %v520
        %v1159 = vunpack.c.l.b16 %v521
        %v1160 = vunpack.c.h.b16 %v521
        %v1161 = vunpack.c.l.b16 %v522
        %v1162 = vunpack.c.h.b16 %v522
        %v1163 = vunpack.c.l.b16 %v523
        %v1164 = vunpack.c.h.b16 %v523
        %v1165 = vunpack.c.l.b16 %v524
        %v1166 = vunpack.c.h.b16 %v524
        %v1167 = vunpack.c.l.b16 %v525
        %v1168 = vunpack.c.h.b16 %v525
        %v1169 = vunpack.c.l.b16 %v526
        %v1170 = vunpack.c.h.b16 %v526
        %v1171 = vunpack.c.l.b16 %v527
        %v1172 = vunpack.c.h.b16 %v527
        %v1173 = vunpack.c.l.b16 %v528
        %v1174 = vunpack.c.h.b16 %v528
        %v1175 = vunpack.c.l.b16 %v529
        %v1176 = vunpack.c.h.b16 %v529
        %v1177 = vunpack.c.l.b16 %v530
        %v1178 = vunpack.c.h.b16 %v530
        %v1179 = vunpack.c.l.b16 %v531
        %v1180 = vunpack.c.h.b16 %v531
        %v1181 = vunpack.c.l.b16 %v532
        %v1182 = vunpack.c.h.b16 %v532
        %v1183 = vunpack.c.l.b16 %v533
        %v1184 = vunpack.c.h.b16 %v533
        %v1185 = vunpack.c.l.b16 %v534
        %v1186 = vunpack.c.h.b16 %v534
        %v1187 = vunpack.c.l.b16 %v535
        %v1188 = vunpack.c.h.b16 %v535
        %v1189 = vunpack.c.l.b16 %v536
        %v1190 = vunpack.c.h.b16 %v536
        %v1191 = vunpack.c.l.b16 %v537
        %v1192 = vunpack.c.h.b16 %v537
        %v1193 = vunpack.c.l.b16 %v538
        %v1194 = vunpack.c.h.b16 %v538
        %v1195 = vunpack.c.l.b16 %v539
        %v1196 = vunpack.c.h.b16 %v539
        %v1197 = vunpack.c.l.b16 %v540
        %v1198 = vunpack.c.h.b16 %v540
        %v1199 = vunpack.c.l.b16 %v541
        %v1200 = vunpack.c.h.b16 %v541
        %v1201 = vunpack.c.l.b16 %v542
        %v1202 = vunpack.c.h.b16 %v542
        %v1203 = vunpack.c.l.b16 %v543
        %v1204 = vunpack.c.h.b16 %v543
        %v1205 = vunpack.c.l.b16 %v544
        %v1206 = vunpack.c.h.b16 %v544
        %v1207 = vunpack.c.l.b16 %v545
        %v1208 = vunpack.c.h.b16 %v545
        %v1209 = vunpack.c.l.b16 %v546
        %v1210 = vunpack.c.h.b16 %v546
        %v1211 = vunpack.c.l.b16 %v547
        %v1212 = vunpack.c.h.b16 %v547
        %v1213 = vunpack.c.l.b16 %v548
        %v1214 = vunpack.c.h.b16 %v548
        %v1215 = vunpack.c.l.b16 %v549
        %v1216 = vunpack.c.h.b16 %v549
        %v1217 = vunpack.c.l.b16 %v550
        %v1218 = vunpack.c.h.b16 %v550
        %v1219 = vunpack.c.l.b16 %v551
        %v1220 = vunpack.c.h.b16 %v551
        %v1221 = vunpack.c.l.b16 %v552
        %v1222 = vunpack.c.h.b16 %v552
        %v1223 = vunpack.c.l.b16 %v553
        %v1224 = vunpack.c.h.b16 %v553
        %v1225 = vunpack.c.l.b16 %v554
        %v1226 = vunpack.c.h.b16 %v554
        %v1227 = vunpack.c.l.b16 %v555
        %v1228 = vunpack.c.h.b16 %v555
        %v1229 = vunpack.c.l.b16 %v556
        %v1230 = vunpack.c.h.b16 %v556
        %v1231 = vunpack.c.l.b16 %v557
        %v1232 = vunpack.c.h.b16 %v557
        %v1233 = vunpack.c.l.b16 %v558
        %v1234 = vunpack.c.h.b16 %v558
        %v1235 = vunpack.c.l.b16 %v559
        %v1236 = vunpack.c.h.b16 %v559
        %v1237 = vunpack.c.l.b16 %v560
        %v1238 = vunpack.c.h.b16 %v560
        %v1239 = vunpack.c.l.b16 %v561
        %v1240 = vunpack.c.h.b16 %v561
        %v1241 = vunpack.c.l.b16 %v562
        %v1242 = vunpack.c.h.b16 %v562
        %v1243 = vunpack.c.l.b16 %v563
        %v1244 = vunpack.c.h.b16 %v563
        %v1245 = vunpack.c.l.b16 %v564
        %v1246 = vunpack.c.h.b16 %v564
        %v1247 = vunpack.c.l.b16 %v565
        %v1248 = vunpack.c.h.b16 %v565
        %v1249 = vunpack.c.l.b16 %v566
        %v1250 = vunpack.c.h.b16 %v566
        %v1251 = vunpack.c.l.b16 %v567
        %v1252 = vunpack.c.h.b16 %v567
        %v1253 = vunpack.c.l.b16 %v568
        %v1254 = vunpack.c.h.b16 %v568
        %v1255 = vunpack.c.l.b16 %v569
        %v1256 = vunpack.c.h.b16 %v569
        %v1257 = vunpack.c.l.b16 %v570
        %v1258 = vunpack.c.h.b16 %v570
        %v1259 = vunpack.c.l.b16 %v571
        %v1260 = vunpack.c.h.b16 %v571
        %v1261 = vunpack.c.l.b16 %v572
        %v1262 = vunpack.c.h.b16 %v572
        %v1263 = vunpack.c.l.b16 %v573
        %v1264 = vunpack.c.h.b16 %v573
        %v1265 = vunpack.c.l.b16 %v574
        %v1266 = vunpack.c.h.b16 %v574
        %v1267 = vunpack.c.l.b16 %v575
        %v1268 = vunpack.c.h.b16 %v575
        %v1269 = vunpack.c.l.b16 %v576
        %v1270 = vunpack.c.h.b16 %v576
        %v1271 = vunpack.c.l.b16 %v577
        %v1272 = vunpack.c.h.b16 %v577
        %v1273 = vunpack.c.l.b16 %v578
        %v1274 = vunpack.c.h.b16 %v578
        %v1275 = vunpack.c.l.b16 %v579
        %v1276 = vunpack.c.h.b16 %v579
        %v1277 = vunpack.c.l.b16 %v580
        %v1278 = vunpack.c.h.b16 %v580
        %v1279 = vunpack.c.l.b16 %v581
        %v1280 = vunpack.c.h.b16 %v581
        %v1281 = vunpack.c.l.b16 %v582
        %v1282 = vunpack.c.h.b16 %v582
        %v1283 = vunpack.c.l.b16 %v583
        %v1284 = vunpack.c.h.b16 %v583
        %v1285 = vunpack.c.l.b16 %v584
        %v1286 = vunpack.c.h.b16 %v584
        %v1287 = vunpack.c.l.b16 %v585
        %v1288 = vunpack.c.h.b16 %v585
        %v1289 = vunpack.c.l.b16 %v586
        %v1290 = vunpack.c.h.b16 %v586
        %v1291 = vunpack.c.l.b16 %v587
        %v1292 = vunpack.c.h.b16 %v587
        %v1293 = vunpack.c.l.b16 %v588
        %v1294 = vunpack.c.h.b16 %v588
        %v1295 = vunpack.c.l.b16 %v589
        %v1296 = vunpack.c.h.b16 %v589
        %v1297 = vunpack.c.l.b16 %v590
        %v1298 = vunpack.c.h.b16 %v590
        %v1299 = vunpack.c.l.b16 %v591
        %v1300 = vunpack.c.h.b16 %v591
        %v1301 = vunpack.c.l.b16 %v592
        %v1302 = vunpack.c.h.b16 %v592
        %v1303 = vunpack.c.l.b16 %v593
        %v1304 = vunpack.c.h.b16 %v593
        %v1305 = vunpack.c.l.b16 %v594
        %v1306 = vunpack.c.h.b16 %v594
        %v1307 = vunpack.c.l.b16 %v595
        %v1308 = vunpack.c.h.b16 %v595
        %v1309 = vunpack.c.l.b16 %v596
        %v1310 = vunpack.c.h.b16 %v596
        %v1311 = vunpack.c.l.b16 %v597
        %v1312 = vunpack.c.h.b16 %v597
        %v1313 = vunpack.c.l.b16 %v598
        %v1314 = vunpack.c.h.b16 %v598
        %v1315 = vunpack.c.l.b16 %v599
        %v1316 = vunpack.c.h.b16 %v599
        %v1317 = vunpack.c.l.b16 %v600
        %v1318 = vunpack.c.h.b16 %v600
        %v1319 = vunpack.c.l.b16 %v601
        %v1320 = vunpack.c.h.b16 %v601
        %v1321 = vunpack.c.l.b16 %v602
        %v1322 = vunpack.c.h.b16 %v602
        %v1323 = vunpack.c.l.b16 %v603
        %v1324 = vunpack.c.h.b16 %v603
        %v1325 = vunpack.c.l.b16 %v604
        %v1326 = vunpack.c.h.b16 %v604
        %v1327 = vunpack.c.l.b16 %v605
        %v1328 = vunpack.c.h.b16 %v605
        %v1329 = vunpack.c.l.b16 %v606
        %v1330 = vunpack.c.h.b16 %v606
        %v1331 = vunpack.c.l.b16 %v607
        %v1332 = vunpack.c.h.b16 %v607
        %v1333 = vunpack.c.l.b16 %v608
        %v1334 = vunpack.c.h.b16 %v608
        %v1335 = vunpack.c.l.b16 %v609
        %v1336 = vunpack.c.h.b16 %v609
        %v1337 = vunpack.c.l.b16 %v610
        %v1338 = vunpack.c.h.b16 %v610
        %v1339 = vunpack.c.l.b16 %v611
        %v1340 = vunpack.c.h.b16 %v611
        %v1341 = vunpack.c.l.b16 %v612
        %v1342 = vunpack.c.h.b16 %v612
        %v1343 = vunpack.c.l.b16 %v613
        %v1344 = vunpack.c.h.b16 %v613
        %v1345 = vunpack.c.l.b16 %v614
        %v1346 = vunpack.c.h.b16 %v614
        %v1347 = vunpack.c.l.b16 %v615
        %v1348 = vunpack.c.h.b16 %v615
        %v1349 = vunpack.c.l.b16 %v616
        %v1350 = vunpack.c.h.b16 %v616
        %v1351 = vunpack.c.l.b16 %v617
        %v1352 = vunpack.c.h.b16 %v617
        %v1353 = vunpack.c.l.b16 %v618
        %v1354 = vunpack.c.h.b16 %v618
        %v1355 = vunpack.c.l.b16 %v619
        %v1356 = vunpack.c.h.b16 %v619
        %v1357 = vunpack.c.l.b16 %v620
        %v1358 = vunpack.c.h.b16 %v620
        %v1359 = vunpack.c.l.b16 %v621
        %v1360 = vunpack.c.h.b16 %v621
        %v1361 = vunpack.c.l.b16 %v622
        %v1362 = vunpack.c.h.b16 %v622
        %v1363 = vunpack.c.l.b16 %v623
        %v1364 = vunpack.c.h.b16 %v623
        %v1365 = vunpack.c.l.b16 %v624
        %v1366 = vunpack.c.h.b16 %v624
        %v1367 = vunpack.c.l.b16 %v625
        %v1368 = vunpack.c.h.b16 %v625
        %v1369 = vunpack.c.l.b16 %v626
        %v1370 = vunpack.c.h.b16 %v626
        %v1371 = vunpack.c.l.b16 %v627
        %v1372 = vunpack.c.h.b16 %v627
        %v1373 = vunpack.c.l.b16 %v628
        %v1374 = vunpack.c.h.b16 %v628
        %v1375 = vunpack.c.l.b16 %v629
        %v1376 = vunpack.c.h.b16 %v629
        %v1377 = vunpack.c.l.b16 %v630
        %v1378 = vunpack.c.h.b16 %v630
        %v1379 = vunpack.c.l.b16 %v631
        %v1380 = vunpack.c.h.b16 %v631
        %v1381 = vunpack.c.l.b16 %v632
        %v1382 = vunpack.c.h.b16 %v632
        %v1383 = vunpack.c.l.b16 %v633
        %v1384 = vunpack.c.h.b16 %v633
        %v1385 = vunpack.c.l.b16 %v634
        %v1386 = vunpack.c.h.b16 %v634
        %v1387 = vunpack.c.l.b16 %v635
        %v1388 = vunpack.c.h.b16 %v635
        %v1389 = vunpack.c.l.b16 %v636
        %v1390 = vunpack.c.h.b16 %v636
        %v1391 = vunpack.c.l.b16 %v637
        %v1392 = vunpack.c.h.b16 %v637
        %v1393 = vunpack.c.l.b16 %v638
        %v1394 = vunpack.c.h.b16 %v638
        %v1395 = vunpack.c.l.b16 %v639
        %v1396 = vunpack.c.h.b16 %v639
        %v1397 = vunpack.c.l.b16 %v640
        %v1398 = vunpack.c.h.b16 %v640
        %v1399 = vunpack.c.l.b16 %v641
        %v1400 = vunpack.c.h.b16 %v641
        %v1401 = vunpack.c.l.b16 %v642
        %v1402 = vunpack.c.h.b16 %v642
        %v1403 = vunpack.c.l.b16 %v643
        %v1404 = vunpack.c.h.b16 %v643
        %v1405 = vunpack.c.l.b16 %v644
        %v1406 = vunpack.c.h.b16 %v644
        %v1407 = vunpack.c.l.b16 %v645
        %v1408 = vunpack.c.h.b16 %v645
        %v1409 = vunpack.c.l.b16 %v646
        %v1410 = vunpack.c.h.b16 %v646
        %v1411 = vunpack.c.l.b16 %v647
        %v1412 = vunpack.c.h.b16 %v647
        %v1413 = vunpack.c.l.b16 %v648
        %v1414 = vunpack.c.h.b16 %v648
        %v1415 = vunpack.c.l.b16 %v649
        %v1416 = vunpack.c.h.b16 %v649
        %v1417 = vunpack.c.l.b16 %v650
        %v1418 = vunpack.c.h.b16 %v650
        %v1419 = vpack.c.b16 %v915, %v907
        %v1420 = vpack.c.b16 %v916, %v908
        %v1421 = vpack.c.b16 %v917, %v909
        %v1422 = vpack.c.b16 %v918, %v910
        %v1423 = vpack.c.b16 %v919, %v911
        %v1424 = vpack.c.b16 %v920, %v912
        %v1425 = vpack.c.b16 %v921, %v913
        %v1426 = vpack.c.b16 %v922, %v914
        %v1427 = vpack.c.b16 %v931, %v923
        %v1428 = vpack.c.b16 %v932, %v924
        %v1429 = vpack.c.b16 %v933, %v925
        %v1430 = vpack.c.b16 %v934, %v926
        %v1431 = vpack.c.b16 %v935, %v927
        %v1432 = vpack.c.b16 %v936, %v928
        %v1433 = vpack.c.b16 %v937, %v929
        %v1434 = vpack.c.b16 %v938, %v930
        %v1435 = vpack.c.b16 %v947, %v939
        %v1436 = vpack.c.b16 %v948, %v940
        %v1437 = vpack.c.b16 %v949, %v941
        %v1438 = vpack.c.b16 %v950, %v942
        %v1439 = vpack.c.b16 %v951, %v943
        %v1440 = vpack.c.b16 %v952, %v944
        %v1441 = vpack.c.b16 %v953, %v945
        %v1442 = vpack.c.b16 %v954, %v946
        %v1443 = vpack.c.b16 %v963, %v955
        %v1444 = vpack.c.b16 %v964, %v956
        %v1445 = vpack.c.b16 %v965, %v957
        %v1446 = vpack.c.b16 %v966, %v958
        %v1447 = vpack.c.b16 %v967, %v959
        %v1448 = vpack.c.b16 %v968, %v960
        %v1449 = vpack.c.b16 %v969, %v961
        %v1450 = vpack.c.b16 %v970, %v962
        %v1451 = vpack.c.b16 %v979, %v971
        %v1452 = vpack.c.b16 %v980, %v972
        %v1453 = vpack.c.b16 %v981, %v973
        %v1454 = vpack.c.b16 %v982, %v974
        %v1455 = vpack.c.b16 %v983, %v975
        %v1456 = vpack.c.b16 %v984, %v976
        %v1457 = vpack.c.b16 %v985, %v977
        %v1458 = vpack.c.b16 %v986, %v978
        %v1459 = vpack.c.b16 %v995, %v987
        %v1460 = vpack.c.b16 %v996, %v988
        %v1461 = vpack.c.b16 %v997, %v989
        %v1462 = vpack.c.b16 %v998, %v990
        %v1463 = vpack.c.b16 %v999, %v991
        %v1464 = vpack.c.b16 %v1000, %v992
        %v1465 = vpack.c.b16 %v1001, %v993
        %v1466 = vpack.c.b16 %v1002, %v994
        %v1467 = vpack.c.b16 %v1011, %v1003
        %v1468 = vpack.c.b16 %v1012, %v1004
        %v1469 = vpack.c.b16 %v1013, %v1005
        %v1470 = vpack.c.b16 %v1014, %v1006
        %v1471 = vpack.c.b16 %v1015, %v1007
        %v1472 = vpack.c.b16 %v1016, %v1008
        %v1473 = vpack.c.b16 %v1017, %v1009
        %v1474 = vpack.c.b16 %v1018, %v1010
        %v1475 = vpack.c.b16 %v1027, %v1019
        %v1476 = vpack.c.b16 %v1028, %v1020
        %v1477 = vpack.c.b16 %v1029, %v1021
        %v1478 = vpack.c.b16 %v1030, %v1022
        %v1479 = vpack.c.b16 %v1031, %v1023
        %v1480 = vpack.c.b16 %v1032, %v1024
        %v1481 = vpack.c.b16 %v1033, %v1025
        %v1482 = vpack.c.b16 %v1034, %v1026
        %v1483 = vpack.c.b16 %v1043, %v1035
        %v1484 = vpack.c.b16 %v1044, %v1036
        %v1485 = vpack.c.b16 %v1045, %v1037
        %v1486 = vpack.c.b16 %v1046, %v1038
        %v1487 = vpack.c.b16 %v1047, %v1039
        %v1488 = vpack.c.b16 %v1048, %v1040
        %v1489 = vpack.c.b16 %v1049, %v1041
        %v1490 = vpack.c.b16 %v1050, %v1042
        %v1491 = vpack.c.b16 %v1059, %v1051
        %v1492 = vpack.c.b16 %v1060, %v1052
        %v1493 = vpack.c.b16 %v1061, %v1053
        %v1494 = vpack.c.b16 %v1062, %v1054
        %v1495 = vpack.c.b16 %v1063, %v1055
        %v1496 = vpack.c.b16 %v1064, %v1056
        %v1497 = vpack.c.b16 %v1065, %v1057
        %v1498 = vpack.c.b16 %v1066, %v1058
        %v1499 = vpack.c.b16 %v1075, %v1067
        %v1500 = vpack.c.b16 %v1076, %v1068
        %v1501 = vpack.c.b16 %v1077, %v1069
        %v1502 = vpack.c.b16 %v1078, %v1070
        %v1503 = vpack.c.b16 %v1079, %v1071
        %v1504 = vpack.c.b16 %v1080, %v1072
        %v1505 = vpack.c.b16 %v1081, %v1073
        %v1506 = vpack.c.b16 %v1082, %v1074
        %v1507 = vpack.c.b16 %v1091, %v1083
        %v1508 = vpack.c.b16 %v1092, %v1084
        %v1509 = vpack.c.b16 %v1093, %v1085
        %v1510 = vpack.c.b16 %v1094, %v1086
        %v1511 = vpack.c.b16 %v1095, %v1087
        %v1512 = vpack.c.b16 %v1096, %v1088
        %v1513 = vpack.c.b16 %v1097, %v1089
        %v1514 = vpack.c.b16 %v1098, %v1090
        %v1515 = vpack.c.b16 %v1107, %v1099
        %v1516 = vpack.c.b16 %v1108, %v1100
        %v1517 = vpack.c.b16 %v1109, %v1101
        %v1518 = vpack.c.b16 %v1110, %v1102
        %v1519 = vpack.c.b16 %v1111, %v1103
        %v1520 = vpack.c.b16 %v1112, %v1104
        %v1521 = vpack.c.b16 %v1113, %v1105
        %v1522 = vpack.c.b16 %v1114, %v1106
        %v1523 = vpack.c.b16 %v1123, %v1115
        %v1524 = vpack.c.b16 %v1124, %v1116
        %v1525 = vpack.c.b16 %v1125, %v1117
        %v1526 = vpack.c.b16 %v1126, %v1118
        %v1527 = vpack.c.b16 %v1127, %v1119
        %v1528 = vpack.c.b16 %v1128, %v1120
        %v1529 = vpack.c.b16 %v1129, %v1121
        %v1530 = vpack.c.b16 %v1130, %v1122
        %v1531 = vpack.c.b16 %v1139, %v1131
        %v1532 = vpack.c.b16 %v1140, %v1132
        %v1533 = vpack.c.b16 %v1141, %v1133
        %v1534 = vpack.c.b16 %v1142, %v1134
        %v1535 = vpack.c.b16 %v1143, %v1135
        %v1536 = vpack.c.b16 %v1144, %v1136
        %v1537 = vpack.c.b16 %v1145, %v1137
        %v1538 = vpack.c.b16 %v1146, %v1138
        %v1539 = vpack.c.b16 %v1155, %v1147
        %v1540 = vpack.c.b16 %v1156, %v1148
        %v1541 = vpack.c.b16 %v1157, %v1149
        %v1542 = vpack.c.b16 %v1158, %v1150
        %v1543 = vpack.c.b16 %v1159, %v1151
        %v1544 = vpack.c.b16 %v1160, %v1152
        %v1545 = vpack.c.b16 %v1161, %v1153
        %v1546 = vpack.c.b16 %v1162, %v1154
        %v1547 = vpack.c.b16 %v1171, %v1163
        %v1548 = vpack.c.b16 %v1172, %v1164
        %v1549 = vpack.c.b16 %v1173, %v1165
        %v1550 = vpack.c.b16 %v1174, %v1166
        %v1551 = vpack.c.b16 %v1175, %v1167
        %v1552 = vpack.c.b16 %v1176, %v1168
        %v1553 = vpack.c.b16 %v1177, %v1169
        %v1554 = vpack.c.b16 %v1178, %v1170
        %v1555 = vpack.c.b16 %v1187, %v1179
        %v1556 = vpack.c.b16 %v1188, %v1180
        %v1557 = vpack.c.b16 %v1189, %v1181
        %v1558 = vpack.c.b16 %v1190, %v1182
        %v1559 = vpack.c.b16 %v1191, %v1183
        %v1560 = vpack.c.b16 %v1192, %v1184
        %v1561 = vpack.c.b16 %v1193, %v1185
        %v1562 = vpack.c.b16 %v1194, %v1186
        %v1563 = vpack.c.b16 %v1203, %v1195
        %v1564 = vpack.c.b16 %v1204, %v1196
        %v1565 = vpack.c.b16 %v1205, %v1197
        %v1566 = vpack.c.b16 %v1206, %v1198
        %v1567 = vpack.c.b16 %v1207, %v1199
        %v1568 = vpack.c.b16 %v1208, %v1200
        %v1569 = vpack.c.b16 %v1209, %v1201
        %v1570 = vpack.c.b16 %v1210, %v1202
        %v1571 = vpack.c.b16 %v1219, %v1211
        %v1572 = vpack.c.b16 %v1220, %v1212
        %v1573 = vpack.c.b16 %v1221, %v1213
        %v1574 = vpack.c.b16 %v1222, %v1214
        %v1575 = vpack.c.b16 %v1223, %v1215
        %v1576 = vpack.c.b16 %v1224, %v1216
        %v1577 = vpack.c.b16 %v1225, %v1217
        %v1578 = vpack.c.b16 %v1226, %v1218
        %v1579 = vpack.c.b16 %v1235, %v1227
        %v1580 = vpack.c.b16 %v1236, %v1228
        %v1581 = vpack.c.b16 %v1237, %v1229
        %v1582 = vpack.c.b16 %v1238, %v1230
        %v1583 = vpack.c.b16 %v1239, %v1231
        %v1584 = vpack.c.b16 %v1240, %v1232
        %v1585 = vpack.c.b16 %v1241, %v1233
        %v1586 = vpack.c.b16 %v1242, %v1234
        %v1587 = vpack.c.b16 %v1251, %v1243
        %v1588 = vpack.c.b16 %v1252, %v1244
        %v1589 = vpack.c.b16 %v1253, %v1245
        %v1590 = vpack.c.b16 %v1254, %v1246
        %v1591 = vpack.c.b16 %v1255, %v1247
        %v1592 = vpack.c.b16 %v1256, %v1248
        %v1593 = vpack.c.b16 %v1257, %v1249
        %v1594 = vpack.c.b16 %v1258, %v1250
        %v1595 = vpack.c.b16 %v1267, %v1259
        %v1596 = vpack.c.b16 %v1268, %v1260
        %v1597 = vpack.c.b16 %v1269, %v1261
        %v1598 = vpack.c.b16 %v1270, %v1262
        %v1599 = vpack.c.b16 %v1271, %v1263
        %v1600 = vpack.c.b16 %v1272, %v1264
        %v1601 = vpack.c.b16 %v1273, %v1265
        %v1602 = vpack.c.b16 %v1274, %v1266
        %v1603 = vpack.c.b16 %v1283, %v1275
        %v1604 = vpack.c.b16 %v1284, %v1276
        %v1605 = vpack.c.b16 %v1285, %v1277
        %v1606 = vpack.c.b16 %v1286, %v1278
        %v1607 = vpack.c.b16 %v1287, %v1279
        %v1608 = vpack.c.b16 %v1288, %v1280
        %v1609 = vpack.c.b16 %v1289, %v1281
        %v1610 = vpack.c.b16 %v1290, %v1282
        %v1611 = vpack.c.b16 %v1299, %v1291
        %v1612 = vpack.c.b16 %v1300, %v1292
        %v1613 = vpack.c.b16 %v1301, %v1293
        %v1614 = vpack.c.b16 %v1302, %v1294
        %v1615 = vpack.c.b16 %v1303, %v1295
        %v1616 = vpack.c.b16 %v1304, %v1296
        %v1617 = vpack.c.b16 %v1305, %v1297
        %v1618 = vpack.c.b16 %v1306, %v1298
        %v1619 = vpack.c.b16 %v1315, %v1307
        %v1620 = vpack.c.b16 %v1316, %v1308
        %v1621 = vpack.c.b16 %v1317, %v1309
        %v1622 = vpack.c.b16 %v1318, %v1310
        %v1623 = vpack.c.b16 %v1319, %v1311
        %v1624 = vpack.c.b16 %v1320, %v1312
        %v1625 = vpack.c.b16 %v1321, %v1313
        %v1626 = vpack.c.b16 %v1322, %v1314
        %v1627 = vpack.c.b16 %v1331, %v1323
        %v1628 = vpack.c.b16 %v1332, %v1324
        %v1629 = vpack.c.b16 %v1333, %v1325
        %v1630 = vpack.c.b16 %v1334, %v1326
        %v1631 = vpack.c.b16 %v1335, %v1327
        %v1632 = vpack.c.b16 %v1336, %v1328
        %v1633 = vpack.c.b16 %v1337, %v1329
        %v1634 = vpack.c.b16 %v1338, %v1330
        %v1635 = vpack.c.b16 %v1347, %v1339
        %v1636 = vpack.c.b16 %v1348, %v1340
        %v1637 = vpack.c.b16 %v1349, %v1341
        %v1638 = vpack.c.b16 %v1350, %v1342
        %v1639 = vpack.c.b16 %v1351, %v1343
        %v1640 = vpack.c.b16 %v1352, %v1344
        %v1641 = vpack.c.b16 %v1353, %v1345
        %v1642 = vpack.c.b16 %v1354, %v1346
        %v1643 = vpack.c.b16 %v1363, %v1355
        %v1644 = vpack.c.b16 %v1364, %v1356
        %v1645 = vpack.c.b16 %v1365, %v1357
        %v1646 = vpack.c.b16 %v1366, %v1358
        %v1647 = vpack.c.b16 %v1367, %v1359
        %v1648 = vpack.c.b16 %v1368, %v1360
        %v1649 = vpack.c.b16 %v1369, %v1361
        %v1650 = vpack.c.b16 %v1370, %v1362
        %v1651 = vpack.c.b16 %v1379, %v1371
        %v1652 = vpack.c.b16 %v1380, %v1372
        %v1653 = vpack.c.b16 %v1381, %v1373
        %v1654 = vpack.c.b16 %v1382, %v1374
        %v1655 = vpack.c.b16 %v1383, %v1375
        %v1656 = vpack.c.b16 %v1384, %v1376
        %v1657 = vpack.c.b16 %v1385, %v1377
        %v1658 = vpack.c.b16 %v1386, %v1378
        %v1659 = vpack.c.b16 %v1395, %v1387
        %v1660 = vpack.c.b16 %v1396, %v1388
        %v1661 = vpack.c.b16 %v1397, %v1389
        %v1662 = vpack.c.b16 %v1398, %v1390
        %v1663 = vpack.c.b16 %v1399, %v1391
        %v1664 = vpack.c.b16 %v1400, %v1392
        %v1665 = vpack.c.b16 %v1401, %v1393
        %v1666 = vpack.c.b16 %v1402, %v1394
        %v1667 = vpack.c.b16 %v1411, %v1403
        %v1668 = vpack.c.b16 %v1412, %v1404
        %v1669 = vpack.c.b16 %v1413, %v1405
        %v1670 = vpack.c.b16 %v1414, %v1406
        %v1671 = vpack.c.b16 %v1415, %v1407
        %v1672 = vpack.c.b16 %v1416, %v1408
        %v1673 = vpack.c.b16 %v1417, %v1409
        %v1674 = vpack.c.b16 %v1418, %v1410
        %1931 = vmatpush.bf16.msra.mxu0 %v1475
        %1932 = vmatpush.bf16.msra.mxu0 %v1467
        %1933 = vmatpush.bf16.msra.mxu0 %v1459
        %1934 = vmatpush.bf16.msra.mxu0 %v1451
        %1935 = vmatpush.bf16.msra.mxu0 %v1443
        %1936 = vmatpush.bf16.msra.mxu0 %v1435
        %1937 = vmatpush.bf16.msra.mxu0 %v1427
        %1938 = vmatpush.bf16.msra.mxu0 %v1419
        %1939 = vmatmul.bf16.gmra.mxu0 %v381
        %v1940 = vpop.f32.mrf.mxu0
        %v1941 = vadd.f32 0.0, %v1940
        %v1942 = vpop.f32.mrf.mxu0
        %1943 = vdwg.mxu0
        %1944 = vmatpush.bf16.msra.mxu0 %v1539
        %1945 = vmatpush.bf16.msra.mxu0 %v1531
        %1946 = vmatpush.bf16.msra.mxu0 %v1523
        %1947 = vmatpush.bf16.msra.mxu0 %v1515
        %1948 = vmatpush.bf16.msra.mxu0 %v1507
        %1949 = vmatpush.bf16.msra.mxu0 %v1499
        %1950 = vmatpush.bf16.msra.mxu0 %v1491
        %1951 = vmatpush.bf16.msra.mxu0 %v1483
        %1952 = vmatmul.bf16.gmra.mxu0 %v385
        %v1953 = vpop.f32.mrf.mxu0
        %v1954 = vadd.f32 %v1941, %v1953
        %v1955 = vpop.f32.mrf.mxu0
        %1956 = vdwg.mxu0
        %1957 = vmatpush.bf16.msra.mxu0 %v1603
        %1958 = vmatpush.bf16.msra.mxu0 %v1595
        %1959 = vmatpush.bf16.msra.mxu0 %v1587
        %1960 = vmatpush.bf16.msra.mxu0 %v1579
        %1961 = vmatpush.bf16.msra.mxu0 %v1571
        %1962 = vmatpush.bf16.msra.mxu0 %v1563
        %1963 = vmatpush.bf16.msra.mxu0 %v1555
        %1964 = vmatpush.bf16.msra.mxu0 %v1547
        %1965 = vmatmul.bf16.gmra.mxu0 %v389
        %v1966 = vpop.f32.mrf.mxu0
        %v1967 = vadd.f32 %v1954, %v1966
        %v1968 = vpop.f32.mrf.mxu0
        %1969 = vdwg.mxu0
        %1970 = vmatpush.bf16.msra.mxu0 %v1667
        %1971 = vmatpush.bf16.msra.mxu0 %v1659
        %1972 = vmatpush.bf16.msra.mxu0 %v1651
        %1973 = vmatpush.bf16.msra.mxu0 %v1643
        %1974 = vmatpush.bf16.msra.mxu0 %v1635
        %1975 = vmatpush.bf16.msra.mxu0 %v1627
        %1976 = vmatpush.bf16.msra.mxu0 %v1619
        %1977 = vmatpush.bf16.msra.mxu0 %v1611
        %1978 = vmatmul.bf16.gmra.mxu0 %v393
        %v1979 = vpop.f32.mrf.mxu0
        %v1980 = vadd.f32 %v1967, %v1979
        %v1981 = vpop.f32.mrf.mxu0
        %1982 = vdwg.mxu0
        %1983 = vmatpush.bf16.msra.mxu0 %v1476
        %1984 = vmatpush.bf16.msra.mxu0 %v1468
        %1985 = vmatpush.bf16.msra.mxu0 %v1460
        %1986 = vmatpush.bf16.msra.mxu0 %v1452
        %1987 = vmatpush.bf16.msra.mxu0 %v1444
        %1988 = vmatpush.bf16.msra.mxu0 %v1436
        %1989 = vmatpush.bf16.msra.mxu0 %v1428
        %1990 = vmatpush.bf16.msra.mxu0 %v1420
        %1991 = vmatmul.bf16.gmra.mxu0 %v381
        %v1992 = vpop.f32.mrf.mxu0
        %v1993 = vadd.f32 0.0, %v1992
        %v1994 = vpop.f32.mrf.mxu0
        %1995 = vdwg.mxu0
        %1996 = vmatpush.bf16.msra.mxu0 %v1540
        %1997 = vmatpush.bf16.msra.mxu0 %v1532
        %1998 = vmatpush.bf16.msra.mxu0 %v1524
        %1999 = vmatpush.bf16.msra.mxu0 %v1516
        %2000 = vmatpush.bf16.msra.mxu0 %v1508
        %2001 = vmatpush.bf16.msra.mxu0 %v1500
        %2002 = vmatpush.bf16.msra.mxu0 %v1492
        %2003 = vmatpush.bf16.msra.mxu0 %v1484
        %2004 = vmatmul.bf16.gmra.mxu0 %v385
        %v2005 = vpop.f32.mrf.mxu0
        %v2006 = vadd.f32 %v1993, %v2005
        %v2007 = vpop.f32.mrf.mxu0
        %2008 = vdwg.mxu0
        %2009 = vmatpush.bf16.msra.mxu0 %v1604
        %2010 = vmatpush.bf16.msra.mxu0 %v1596
        %2011 = vmatpush.bf16.msra.mxu0 %v1588
        %2012 = vmatpush.bf16.msra.mxu0 %v1580
        %2013 = vmatpush.bf16.msra.mxu0 %v1572
        %2014 = vmatpush.bf16.msra.mxu0 %v1564
        %2015 = vmatpush.bf16.msra.mxu0 %v1556
        %2016 = vmatpush.bf16.msra.mxu0 %v1548
        %2017 = vmatmul.bf16.gmra.mxu0 %v389
        %v2018 = vpop.f32.mrf.mxu0
        %v2019 = vadd.f32 %v2006, %v2018
        %v2020 = vpop.f32.mrf.mxu0
        %2021 = vdwg.mxu0
        %2022 = vmatpush.bf16.msra.mxu0 %v1668
        %2023 = vmatpush.bf16.msra.mxu0 %v1660
        %2024 = vmatpush.bf16.msra.mxu0 %v1652
        %2025 = vmatpush.bf16.msra.mxu0 %v1644
        %2026 = vmatpush.bf16.msra.mxu0 %v1636
        %2027 = vmatpush.bf16.msra.mxu0 %v1628
        %2028 = vmatpush.bf16.msra.mxu0 %v1620
        %2029 = vmatpush.bf16.msra.mxu0 %v1612
        %2030 = vmatmul.bf16.gmra.mxu0 %v393
        %v2031 = vpop.f32.mrf.mxu0
        %v2032 = vadd.f32 %v2019, %v2031
        %v2033 = vpop.f32.mrf.mxu0
        %2034 = vdwg.mxu0
        %2035 = vmatpush.bf16.msra.mxu0 %v1477
        %2036 = vmatpush.bf16.msra.mxu0 %v1469
        %2037 = vmatpush.bf16.msra.mxu0 %v1461
        %2038 = vmatpush.bf16.msra.mxu0 %v1453
        %2039 = vmatpush.bf16.msra.mxu0 %v1445
        %2040 = vmatpush.bf16.msra.mxu0 %v1437
        %2041 = vmatpush.bf16.msra.mxu0 %v1429
        %2042 = vmatpush.bf16.msra.mxu0 %v1421
        %2043 = vmatmul.bf16.gmra.mxu0 %v381
        %v2044 = vpop.f32.mrf.mxu0
        %v2045 = vadd.f32 0.0, %v2044
        %v2046 = vpop.f32.mrf.mxu0
        %2047 = vdwg.mxu0
        %2048 = vmatpush.bf16.msra.mxu0 %v1541
        %2049 = vmatpush.bf16.msra.mxu0 %v1533
        %2050 = vmatpush.bf16.msra.mxu0 %v1525
        %2051 = vmatpush.bf16.msra.mxu0 %v1517
        %2052 = vmatpush.bf16.msra.mxu0 %v1509
        %2053 = vmatpush.bf16.msra.mxu0 %v1501
        %2054 = vmatpush.bf16.msra.mxu0 %v1493
        %2055 = vmatpush.bf16.msra.mxu0 %v1485
        %2056 = vmatmul.bf16.gmra.mxu0 %v385
        %v2057 = vpop.f32.mrf.mxu0
        %v2058 = vadd.f32 %v2045, %v2057
        %v2059 = vpop.f32.mrf.mxu0
        %2060 = vdwg.mxu0
        %2061 = vmatpush.bf16.msra.mxu0 %v1605
        %2062 = vmatpush.bf16.msra.mxu0 %v1597
        %2063 = vmatpush.bf16.msra.mxu0 %v1589
        %2064 = vmatpush.bf16.msra.mxu0 %v1581
        %2065 = vmatpush.bf16.msra.mxu0 %v1573
        %2066 = vmatpush.bf16.msra.mxu0 %v1565
        %2067 = vmatpush.bf16.msra.mxu0 %v1557
        %2068 = vmatpush.bf16.msra.mxu0 %v1549
        %2069 = vmatmul.bf16.gmra.mxu0 %v389
        %v2070 = vpop.f32.mrf.mxu0
        %v2071 = vadd.f32 %v2058, %v2070
        %v2072 = vpop.f32.mrf.mxu0
        %2073 = vdwg.mxu0
        %2074 = vmatpush.bf16.msra.mxu0 %v1669
        %2075 = vmatpush.bf16.msra.mxu0 %v1661
        %2076 = vmatpush.bf16.msra.mxu0 %v1653
        %2077 = vmatpush.bf16.msra.mxu0 %v1645
        %2078 = vmatpush.bf16.msra.mxu0 %v1637
        %2079 = vmatpush.bf16.msra.mxu0 %v1629
        %2080 = vmatpush.bf16.msra.mxu0 %v1621
        %2081 = vmatpush.bf16.msra.mxu0 %v1613
        %2082 = vmatmul.bf16.gmra.mxu0 %v393
        %v2083 = vpop.f32.mrf.mxu0
        %v2084 = vadd.f32 %v2071, %v2083
        %v2085 = vpop.f32.mrf.mxu0
        %2086 = vdwg.mxu0
        %2087 = vmatpush.bf16.msra.mxu0 %v1478
        %2088 = vmatpush.bf16.msra.mxu0 %v1470
        %2089 = vmatpush.bf16.msra.mxu0 %v1462
        %2090 = vmatpush.bf16.msra.mxu0 %v1454
        %2091 = vmatpush.bf16.msra.mxu0 %v1446
        %2092 = vmatpush.bf16.msra.mxu0 %v1438
        %2093 = vmatpush.bf16.msra.mxu0 %v1430
        %2094 = vmatpush.bf16.msra.mxu0 %v1422
        %2095 = vmatmul.bf16.gmra.mxu0 %v381
        %v2096 = vpop.f32.mrf.mxu0
        %v2097 = vadd.f32 0.0, %v2096
        %v2098 = vpop.f32.mrf.mxu0
        %2099 = vdwg.mxu0
        %2100 = vmatpush.bf16.msra.mxu0 %v1542
        %2101 = vmatpush.bf16.msra.mxu0 %v1534
        %2102 = vmatpush.bf16.msra.mxu0 %v1526
        %2103 = vmatpush.bf16.msra.mxu0 %v1518
        %2104 = vmatpush.bf16.msra.mxu0 %v1510
        %2105 = vmatpush.bf16.msra.mxu0 %v1502
        %2106 = vmatpush.bf16.msra.mxu0 %v1494
        %2107 = vmatpush.bf16.msra.mxu0 %v1486
        %2108 = vmatmul.bf16.gmra.mxu0 %v385
        %v2109 = vpop.f32.mrf.mxu0
        %v2110 = vadd.f32 %v2097, %v2109
        %v2111 = vpop.f32.mrf.mxu0
        %2112 = vdwg.mxu0
        %2113 = vmatpush.bf16.msra.mxu0 %v1606
        %2114 = vmatpush.bf16.msra.mxu0 %v1598
        %2115 = vmatpush.bf16.msra.mxu0 %v1590
        %2116 = vmatpush.bf16.msra.mxu0 %v1582
        %2117 = vmatpush.bf16.msra.mxu0 %v1574
        %2118 = vmatpush.bf16.msra.mxu0 %v1566
        %2119 = vmatpush.bf16.msra.mxu0 %v1558
        %2120 = vmatpush.bf16.msra.mxu0 %v1550
        %2121 = vmatmul.bf16.gmra.mxu0 %v389
        %v2122 = vpop.f32.mrf.mxu0
        %v2123 = vadd.f32 %v2110, %v2122
        %v2124 = vpop.f32.mrf.mxu0
        %2125 = vdwg.mxu0
        %2126 = vmatpush.bf16.msra.mxu0 %v1670
        %2127 = vmatpush.bf16.msra.mxu0 %v1662
        %2128 = vmatpush.bf16.msra.mxu0 %v1654
        %2129 = vmatpush.bf16.msra.mxu0 %v1646
        %2130 = vmatpush.bf16.msra.mxu0 %v1638
        %2131 = vmatpush.bf16.msra.mxu0 %v1630
        %2132 = vmatpush.bf16.msra.mxu0 %v1622
        %2133 = vmatpush.bf16.msra.mxu0 %v1614
        %2134 = vmatmul.bf16.gmra.mxu0 %v393
        %v2135 = vpop.f32.mrf.mxu0
        %v2136 = vadd.f32 %v2123, %v2135
        %v2137 = vpop.f32.mrf.mxu0
        %2138 = vdwg.mxu0
        %2139 = vmatpush.bf16.msra.mxu0 %v1479
        %2140 = vmatpush.bf16.msra.mxu0 %v1471
        %2141 = vmatpush.bf16.msra.mxu0 %v1463
        %2142 = vmatpush.bf16.msra.mxu0 %v1455
        %2143 = vmatpush.bf16.msra.mxu0 %v1447
        %2144 = vmatpush.bf16.msra.mxu0 %v1439
        %2145 = vmatpush.bf16.msra.mxu0 %v1431
        %2146 = vmatpush.bf16.msra.mxu0 %v1423
        %2147 = vmatmul.bf16.gmra.mxu0 %v381
        %v2148 = vpop.f32.mrf.mxu0
        %v2149 = vadd.f32 0.0, %v2148
        %v2150 = vpop.f32.mrf.mxu0
        %2151 = vdwg.mxu0
        %2152 = vmatpush.bf16.msra.mxu0 %v1543
        %2153 = vmatpush.bf16.msra.mxu0 %v1535
        %2154 = vmatpush.bf16.msra.mxu0 %v1527
        %2155 = vmatpush.bf16.msra.mxu0 %v1519
        %2156 = vmatpush.bf16.msra.mxu0 %v1511
        %2157 = vmatpush.bf16.msra.mxu0 %v1503
        %2158 = vmatpush.bf16.msra.mxu0 %v1495
        %2159 = vmatpush.bf16.msra.mxu0 %v1487
        %2160 = vmatmul.bf16.gmra.mxu0 %v385
        %v2161 = vpop.f32.mrf.mxu0
        %v2162 = vadd.f32 %v2149, %v2161
        %v2163 = vpop.f32.mrf.mxu0
        %2164 = vdwg.mxu0
        %2165 = vmatpush.bf16.msra.mxu0 %v1607
        %2166 = vmatpush.bf16.msra.mxu0 %v1599
        %2167 = vmatpush.bf16.msra.mxu0 %v1591
        %2168 = vmatpush.bf16.msra.mxu0 %v1583
        %2169 = vmatpush.bf16.msra.mxu0 %v1575
        %2170 = vmatpush.bf16.msra.mxu0 %v1567
        %2171 = vmatpush.bf16.msra.mxu0 %v1559
        %2172 = vmatpush.bf16.msra.mxu0 %v1551
        %2173 = vmatmul.bf16.gmra.mxu0 %v389
        %v2174 = vpop.f32.mrf.mxu0
        %v2175 = vadd.f32 %v2162, %v2174
        %v2176 = vpop.f32.mrf.mxu0
        %2177 = vdwg.mxu0
        %2178 = vmatpush.bf16.msra.mxu0 %v1671
        %2179 = vmatpush.bf16.msra.mxu0 %v1663
        %2180 = vmatpush.bf16.msra.mxu0 %v1655
        %2181 = vmatpush.bf16.msra.mxu0 %v1647
        %2182 = vmatpush.bf16.msra.mxu0 %v1639
        %2183 = vmatpush.bf16.msra.mxu0 %v1631
        %2184 = vmatpush.bf16.msra.mxu0 %v1623
        %2185 = vmatpush.bf16.msra.mxu0 %v1615
        %2186 = vmatmul.bf16.gmra.mxu0 %v393
        %v2187 = vpop.f32.mrf.mxu0
        %v2188 = vadd.f32 %v2175, %v2187
        %v2189 = vpop.f32.mrf.mxu0
        %2190 = vdwg.mxu0
        %2191 = vmatpush.bf16.msra.mxu0 %v1480
        %2192 = vmatpush.bf16.msra.mxu0 %v1472
        %2193 = vmatpush.bf16.msra.mxu0 %v1464
        %2194 = vmatpush.bf16.msra.mxu0 %v1456
        %2195 = vmatpush.bf16.msra.mxu0 %v1448
        %2196 = vmatpush.bf16.msra.mxu0 %v1440
        %2197 = vmatpush.bf16.msra.mxu0 %v1432
        %2198 = vmatpush.bf16.msra.mxu0 %v1424
        %2199 = vmatmul.bf16.gmra.mxu0 %v381
        %v2200 = vpop.f32.mrf.mxu0
        %v2201 = vadd.f32 0.0, %v2200
        %v2202 = vpop.f32.mrf.mxu0
        %2203 = vdwg.mxu0
        %2204 = vmatpush.bf16.msra.mxu0 %v1544
        %2205 = vmatpush.bf16.msra.mxu0 %v1536
        %2206 = vmatpush.bf16.msra.mxu0 %v1528
        %2207 = vmatpush.bf16.msra.mxu0 %v1520
        %2208 = vmatpush.bf16.msra.mxu0 %v1512
        %2209 = vmatpush.bf16.msra.mxu0 %v1504
        %2210 = vmatpush.bf16.msra.mxu0 %v1496
        %2211 = vmatpush.bf16.msra.mxu0 %v1488
        %2212 = vmatmul.bf16.gmra.mxu0 %v385
        %v2213 = vpop.f32.mrf.mxu0
        %v2214 = vadd.f32 %v2201, %v2213
        %v2215 = vpop.f32.mrf.mxu0
        %2216 = vdwg.mxu0
        %2217 = vmatpush.bf16.msra.mxu0 %v1608
        %2218 = vmatpush.bf16.msra.mxu0 %v1600
        %2219 = vmatpush.bf16.msra.mxu0 %v1592
        %2220 = vmatpush.bf16.msra.mxu0 %v1584
        %2221 = vmatpush.bf16.msra.mxu0 %v1576
        %2222 = vmatpush.bf16.msra.mxu0 %v1568
        %2223 = vmatpush.bf16.msra.mxu0 %v1560
        %2224 = vmatpush.bf16.msra.mxu0 %v1552
        %2225 = vmatmul.bf16.gmra.mxu0 %v389
        %v2226 = vpop.f32.mrf.mxu0
        %v2227 = vadd.f32 %v2214, %v2226
        %v2228 = vpop.f32.mrf.mxu0
        %2229 = vdwg.mxu0
        %2230 = vmatpush.bf16.msra.mxu0 %v1672
        %2231 = vmatpush.bf16.msra.mxu0 %v1664
        %2232 = vmatpush.bf16.msra.mxu0 %v1656
        %2233 = vmatpush.bf16.msra.mxu0 %v1648
        %2234 = vmatpush.bf16.msra.mxu0 %v1640
        %2235 = vmatpush.bf16.msra.mxu0 %v1632
        %2236 = vmatpush.bf16.msra.mxu0 %v1624
        %2237 = vmatpush.bf16.msra.mxu0 %v1616
        %2238 = vmatmul.bf16.gmra.mxu0 %v393
        %v2239 = vpop.f32.mrf.mxu0
        %v2240 = vadd.f32 %v2227, %v2239
        %v2241 = vpop.f32.mrf.mxu0
        %2242 = vdwg.mxu0
        %2243 = vmatpush.bf16.msra.mxu0 %v1481
        %2244 = vmatpush.bf16.msra.mxu0 %v1473
        %2245 = vmatpush.bf16.msra.mxu0 %v1465
        %2246 = vmatpush.bf16.msra.mxu0 %v1457
        %2247 = vmatpush.bf16.msra.mxu0 %v1449
        %2248 = vmatpush.bf16.msra.mxu0 %v1441
        %2249 = vmatpush.bf16.msra.mxu0 %v1433
        %2250 = vmatpush.bf16.msra.mxu0 %v1425
        %2251 = vmatmul.bf16.gmra.mxu0 %v381
        %v2252 = vpop.f32.mrf.mxu0
        %v2253 = vadd.f32 0.0, %v2252
        %v2254 = vpop.f32.mrf.mxu0
        %2255 = vdwg.mxu0
        %2256 = vmatpush.bf16.msra.mxu0 %v1545
        %2257 = vmatpush.bf16.msra.mxu0 %v1537
        %2258 = vmatpush.bf16.msra.mxu0 %v1529
        %2259 = vmatpush.bf16.msra.mxu0 %v1521
        %2260 = vmatpush.bf16.msra.mxu0 %v1513
        %2261 = vmatpush.bf16.msra.mxu0 %v1505
        %2262 = vmatpush.bf16.msra.mxu0 %v1497
        %2263 = vmatpush.bf16.msra.mxu0 %v1489
        %2264 = vmatmul.bf16.gmra.mxu0 %v385
        %v2265 = vpop.f32.mrf.mxu0
        %v2266 = vadd.f32 %v2253, %v2265
        %v2267 = vpop.f32.mrf.mxu0
        %2268 = vdwg.mxu0
        %2269 = vmatpush.bf16.msra.mxu0 %v1609
        %2270 = vmatpush.bf16.msra.mxu0 %v1601
        %2271 = vmatpush.bf16.msra.mxu0 %v1593
        %2272 = vmatpush.bf16.msra.mxu0 %v1585
        %2273 = vmatpush.bf16.msra.mxu0 %v1577
        %2274 = vmatpush.bf16.msra.mxu0 %v1569
        %2275 = vmatpush.bf16.msra.mxu0 %v1561
        %2276 = vmatpush.bf16.msra.mxu0 %v1553
        %2277 = vmatmul.bf16.gmra.mxu0 %v389
        %v2278 = vpop.f32.mrf.mxu0
        %v2279 = vadd.f32 %v2266, %v2278
        %v2280 = vpop.f32.mrf.mxu0
        %2281 = vdwg.mxu0
        %2282 = vmatpush.bf16.msra.mxu0 %v1673
        %2283 = vmatpush.bf16.msra.mxu0 %v1665
        %2284 = vmatpush.bf16.msra.mxu0 %v1657
        %2285 = vmatpush.bf16.msra.mxu0 %v1649
        %2286 = vmatpush.bf16.msra.mxu0 %v1641
        %2287 = vmatpush.bf16.msra.mxu0 %v1633
        %2288 = vmatpush.bf16.msra.mxu0 %v1625
        %2289 = vmatpush.bf16.msra.mxu0 %v1617
        %2290 = vmatmul.bf16.gmra.mxu0 %v393
        %v2291 = vpop.f32.mrf.mxu0
        %v2292 = vadd.f32 %v2279, %v2291
        %v2293 = vpop.f32.mrf.mxu0
        %2294 = vdwg.mxu0
        %2295 = vmatpush.bf16.msra.mxu0 %v1482
        %2296 = vmatpush.bf16.msra.mxu0 %v1474
        %2297 = vmatpush.bf16.msra.mxu0 %v1466
        %2298 = vmatpush.bf16.msra.mxu0 %v1458
        %2299 = vmatpush.bf16.msra.mxu0 %v1450
        %2300 = vmatpush.bf16.msra.mxu0 %v1442
        %2301 = vmatpush.bf16.msra.mxu0 %v1434
        %2302 = vmatpush.bf16.msra.mxu0 %v1426
        %2303 = vmatmul.bf16.gmra.mxu0 %v381
        %v2304 = vpop.f32.mrf.mxu0
        %v2305 = vadd.f32 0.0, %v2304
        %v2306 = vpop.f32.mrf.mxu0
        %2307 = vdwg.mxu0
        %2308 = vmatpush.bf16.msra.mxu0 %v1546
        %2309 = vmatpush.bf16.msra.mxu0 %v1538
        %2310 = vmatpush.bf16.msra.mxu0 %v1530
        %2311 = vmatpush.bf16.msra.mxu0 %v1522
        %2312 = vmatpush.bf16.msra.mxu0 %v1514
        %2313 = vmatpush.bf16.msra.mxu0 %v1506
        %2314 = vmatpush.bf16.msra.mxu0 %v1498
        %2315 = vmatpush.bf16.msra.mxu0 %v1490
        %2316 = vmatmul.bf16.gmra.mxu0 %v385
        %v2317 = vpop.f32.mrf.mxu0
        %v2318 = vadd.f32 %v2305, %v2317
        %v2319 = vpop.f32.mrf.mxu0
        %2320 = vdwg.mxu0
        %2321 = vmatpush.bf16.msra.mxu0 %v1610
        %2322 = vmatpush.bf16.msra.mxu0 %v1602
        %2323 = vmatpush.bf16.msra.mxu0 %v1594
        %2324 = vmatpush.bf16.msra.mxu0 %v1586
        %2325 = vmatpush.bf16.msra.mxu0 %v1578
        %2326 = vmatpush.bf16.msra.mxu0 %v1570
        %2327 = vmatpush.bf16.msra.mxu0 %v1562
        %2328 = vmatpush.bf16.msra.mxu0 %v1554
        %2329 = vmatmul.bf16.gmra.mxu0 %v389
        %v2330 = vpop.f32.mrf.mxu0
        %v2331 = vadd.f32 %v2318, %v2330
        %v2332 = vpop.f32.mrf.mxu0
        %2333 = vdwg.mxu0
        %2334 = vmatpush.bf16.msra.mxu0 %v1674
        %2335 = vmatpush.bf16.msra.mxu0 %v1666
        %2336 = vmatpush.bf16.msra.mxu0 %v1658
        %2337 = vmatpush.bf16.msra.mxu0 %v1650
        %2338 = vmatpush.bf16.msra.mxu0 %v1642
        %2339 = vmatpush.bf16.msra.mxu0 %v1634
        %2340 = vmatpush.bf16.msra.mxu0 %v1626
        %2341 = vmatpush.bf16.msra.mxu0 %v1618
        %2342 = vmatmul.bf16.gmra.mxu0 %v393
        %v2343 = vpop.f32.mrf.mxu0
        %v2344 = vadd.f32 %v2331, %v2343
        %v2345 = vpop.f32.mrf.mxu0
        %2346 = vdwg.mxu0
        %v2347 = vrot.slane %v2084, 4
        %vm2348 = vcmask 1047556
        %v2349 = vsel %vm2348, %v2347, %v1980
        %v2351 = vunpack.c.l.s4 1983009808
        %v2352 = vunpack.c.0.s8 %v2351
        %v2353 = vperm.slane %v2349, %v2352
        %v2354 = vrot.slane %v2136, 4
        %v2355 = vsel %vm2348, %v2354, %v2032
        %v2357 = vunpack.c.l.s4 1983009808
        %v2358 = vunpack.c.0.s8 %v2357
        %v2359 = vperm.slane %v2355, %v2358
        %v2360 = vrot.slane %v2292, 4
        %v2361 = vsel %vm2348, %v2360, %v2188
        %v2363 = vunpack.c.l.s4 1983009808
        %v2364 = vunpack.c.0.s8 %v2363
        %v2365 = vperm.slane %v2361, %v2364
        %v2366 = vrot.slane %v2344, 4
        %v2367 = vsel %vm2348, %v2366, %v2240
        %v2369 = vunpack.c.l.s4 1983009808
        %v2370 = vunpack.c.0.s8 %v2369
        %v2371 = vperm.slane %v2367, %v2370
        %v2372 = vrot.slane %v2359, 4
        %v2373 = vsel %vm2348, %v2372, %v2353
        %v2375 = vunpack.c.l.s4 1934713408
        %v2376 = vunpack.c.0.s8 %v2375
        %v2377 = vperm.slane %v2373, %v2376
        %v2378 = vrot.slane %v2371, 4
        %v2379 = vsel %vm2348, %v2378, %v2365
        %v2381 = vunpack.c.l.s4 1934713408
        %v2382 = vunpack.c.0.s8 %v2381
        %v2383 = vperm.slane %v2379, %v2382
        %v2384 = vrot.slane %v2383, 4
        %v2385 = vsel %vm2348, %v2384, %v2377
        %v2386 = vrot.slane %v2377, 4
        %v2387 = vsel %vm2348, %v2383, %v2386
        %v2388 = vld [vmem:[%s359] sm:$0xff]
        %2390 = vset.pattern.permute.xlu0 0
        %2391 = vperm.xlu0 %2390, %v2388
        %v2392 = vpop.permute.xlu0 %2391
        %v2394 = vadd.f32 %v2385, %v2392
        %v2395 = vadd.f32 %v2387, %v2392
        %v2396 = vxor.u32 %v2394, 2147483648
        %v2397 = vxor.u32 %v2395, 2147483648
        %v2398 = vmul.f32 %v2396, 1.442695
        %v2399 = vpow.pop %v2398
        %v2400 = vmul.f32 %v2397, 1.442695
        %v2401 = vpow.pop %v2400
        %v2402 = vadd.f32 %v2399, 1.0
        %v2403 = vadd.f32 %v2401, 1.0
        %v2404 = vrcp.pop %v2402
        %v2405 = vmul.f32 %v2402, %v2404
        %v2406 = vsub.f32 1.0, %v2405
        %v2407 = vmul.f32 %v2404, %v2406
        %v2408 = vadd.f32 %v2404, %v2407
        %vm2409 = vweird.f32 %v2402
        %vm2410 = vweird.f32 %v2404
        %vm2411 = vmor %vm2409, %vm2410
        %v2412 = vsel %vm2411, %v2404, %v2408
        %v2413 = vand.u32 2147483647, %v2402
        %vm2414 = vcmp.eq.f32.partialorder %v2413, 8.507059e+37
        %v2415 = vand.u32 %v2402, 2147483648
        %v2416 = vor.u32 1.1754944e-38, %v2415
        %v2417 = vsel %vm2414, %v2416, %v2412
        %v2418 = vmul.f32 1.0, %v2417
        %v2419 = vrcp.pop %v2403
        %v2420 = vmul.f32 %v2403, %v2419
        %v2421 = vsub.f32 1.0, %v2420
        %v2422 = vmul.f32 %v2419, %v2421
        %v2423 = vadd.f32 %v2419, %v2422
        %vm2424 = vweird.f32 %v2403
        %vm2425 = vweird.f32 %v2419
        %vm2426 = vmor %vm2424, %vm2425
        %v2427 = vsel %vm2426, %v2419, %v2423
        %v2428 = vand.u32 2147483647, %v2403
        %vm2429 = vcmp.eq.f32.partialorder %v2428, 8.507059e+37
        %v2430 = vand.u32 %v2403, 2147483648
        %v2431 = vor.u32 1.1754944e-38, %v2430
        %v2432 = vsel %vm2429, %v2431, %v2427
        %v2433 = vmul.f32 1.0, %v2432
        %v2434 = vmul.f32 %v2394, %v2418
        %v2435 = vmul.f32 %v2395, %v2433
        %v2436 = vld [vmem:[#allocation5] sm:$0xf]
        %v2437 = vld [vmem:[%s4] sm:$0xff]
        %v2438 = vpack.c.bf16 %v2434, %v2434
        %v2439 = vpack.c.bf16 %v2435, %v2435
        %2441 = vset.pattern.permute.xlu0 0
        %2442 = vperm.xlu0 %2441, %v2437
        %v2443 = vpop.permute.xlu0 %2442
        %vm2445 = vcmask 64512
        %v2447 = vsel %vm2445, %v2436, 0
        %vm2449 = vcmask 1043456
        %v2451 = vsel %vm2449, %v2438, 0
        %2453 = vmatpush.bf16.msra.mxu0 0
        %2454 = vmatpush.bf16.msra.mxu0 0
        %2455 = vmatpush.bf16.msra.mxu0 0
        %2456 = vmatpush.bf16.msra.mxu0 0
        %2457 = vmatpush.bf16.msra.mxu0 0
        %2458 = vmatpush.bf16.msra.mxu0 0
        %2459 = vmatpush.bf16.msra.mxu0 0
        %2460 = vmatpush.bf16.msra.mxu0 %v2451
        %2461 = vmatmul.bf16.gmra.mxu0 %v2447
        %v2462 = vpop.f32.mrf.mxu0
        %v2463 = vadd.f32 %v2443, %v2462
        %v2464 = vpop.f32.mrf.mxu0
        %2465 = vdwg.mxu0
        %2466 = vst [vmem:[%s354] sm:$0xff] %v2463
        %v2468 = vsel %vm2449, %v2439, 0
        %2470 = vmatpush.bf16.msra.mxu0 0
        %2471 = vmatpush.bf16.msra.mxu0 0
        %2472 = vmatpush.bf16.msra.mxu0 0
        %2473 = vmatpush.bf16.msra.mxu0 0
        %2474 = vmatpush.bf16.msra.mxu0 0
        %2475 = vmatpush.bf16.msra.mxu0 0
        %2476 = vmatpush.bf16.msra.mxu0 0
        %2477 = vmatpush.bf16.msra.mxu0 %v2468
        %2478 = vmatmul.bf16.gmra.mxu0 %v2447
        %v2479 = vpop.f32.mrf.mxu0
        %v2480 = vadd.f32 %v2443, %v2479
        %v2481 = vpop.f32.mrf.mxu0
        %2482 = vdwg.mxu0
        %s2483 = scalar_lea.vmem %s354, 8 [#allocation7]
        %2484 = vst [vmem:[%s2483] sm:$0xff] %v2480
        %s2485 = sand.u32 %s164, 1
        %s2486 = sand.u32 %s164, 1
        %s2487 = smul.addr %s2486, 16
        %s2488 = scalar_lea.vmem [#allocation7], %s2487
        // Predicated region
        $region90: #{grid_conv_forward.1} parent=76 // pred_check
          %p2489 = pneg %p174
        $region91: #{grid_conv_forward.1} parent=76 // pred_check_branch
          %2491 = sbr.rel (%p2489) target = $region93
        $region92: #{grid_conv_forward.1} parent=76 // pred_region
          %s2492 = smul.u32 2, %s25
          %s2493 = smul.addr %s2492, 2
          %s2494 = sadd.s32 %s24, %s2493
          %s2495 = smul.addr %s2494, 8
          %s2496 = scalar_lea.vmem %s5, %s2495
          // Predicated region
          $region94: #{grid_conv_forward.1} parent=92 // pred_check
            _
          $region95: #{grid_conv_forward.1} parent=92 // pred_check_branch
            %2498 = sbr.rel (0) target = $region97
          $region96: #{grid_conv_forward.1} parent=92 // pred_region
            // Predicated region
            $region98: #{grid_conv_forward.1} parent=96 // pred_check
              _
            $region99: #{grid_conv_forward.1} parent=96 // pred_check_branch
              %2500 = sbr.rel (0) target = $region101
            $region100: #{grid_conv_forward.1} parent=96 // pred_region
              // Predicated region
              $region113: #{grid_conv_forward.1} parent=100 // pred_check
                _
              $region114: #{grid_conv_forward.1} parent=100 // pred_check_branch
                %2518 = sbr.rel (0) target = $region116
              $region115: #{grid_conv_forward.1} parent=100 // pred_region
                loop: start=0, step=1, limit=1
                $region117: #{grid_conv_forward.1} parent=115 // loop_pre_header
                  _
                $region118: #{grid_conv_forward.1} parent=115 // loop_header
                  %s2520 = sphi 0, %s2524
                  %p2521 = scmp.ge.s32.totalorder %s2520, 1
                  %s2525 = sphi %s2488, %s2488
                  %s2526 = sphi %s2496, %s2496
                $region119: #{grid_conv_forward.1} parent=115 // loop_header_branch
                  %2523 = sbr.rel (%p2521) target = $region123
                $region120: #{grid_conv_forward.1} parent=115 // loop_body
                  %v2527 = vld [vmem:[%s2525] sm:$0xff]
                  %2528 = vst [vmem:[%s2526] sm:$0xff] %v2527
                  %v2529 = vld [vmem:[%s2525 + $0x8] sm:$0xff]
                  %2530 = vst [vmem:[%s2526 + $0x10] sm:$0xff] %v2529
                $region121: #{grid_conv_forward.1} parent=115 // loop_footer
                  %s2524 = sadd.s32 1, %s2520
                $region122: #{grid_conv_forward.1} parent=115 // loop_footer_branch
                  %2519 = sbr.rel target = $region118
                $region123: #{grid_conv_forward.1} parent=115 // loop_exit
                  _
              $region116: #{grid_conv_forward.1} parent=100 // pred_fallthru
                _
              // Predicated region
              $region124: #{grid_conv_forward.1} parent=100 // pred_check
                _
              $region125: #{grid_conv_forward.1} parent=100 // pred_check_branch
                %2532 = sbr.rel target = $region127
              $region126: #{grid_conv_forward.1} parent=100 // pred_region
                _
              $region127: #{grid_conv_forward.1} parent=100 // pred_fallthru
                _
            $region101: #{grid_conv_forward.1} parent=96 // pred_fallthru
              _
            // Predicated region
            $region102: #{grid_conv_forward.1} parent=96 // pred_check
              _
            $region103: #{grid_conv_forward.1} parent=96 // pred_check_branch
              %2502 = sbr.rel target = $region105
            $region104: #{grid_conv_forward.1} parent=96 // pred_region
              %s2504 = ssub.s32 256, 1
              loop: start=0, step=1, limit=1
              $region106: #{grid_conv_forward.1} parent=104 // loop_pre_header
                _
              $region107: #{grid_conv_forward.1} parent=104 // loop_header
                %s2506 = sphi 0, %s2510
                %p2507 = scmp.ge.s32.totalorder %s2506, 1
                %s2511 = sphi %s2488, %s2488
                %s2512 = sphi %s2496, %s2496
              $region108: #{grid_conv_forward.1} parent=104 // loop_header_branch
                %2509 = sbr.rel (%p2507) target = $region112
              $region109: #{grid_conv_forward.1} parent=104 // loop_body
                %v2513 = vld [vmem:[%s2511] sm:%s2504]
                %2514 = vst [vmem:[%s2512] sm:%s2504] %v2513
                %v2515 = vld [vmem:[%s2511 + $0x8] sm:%s2504]
                %2516 = vst [vmem:[%s2512 + $0x10] sm:%s2504] %v2515
              $region110: #{grid_conv_forward.1} parent=104 // loop_footer
                %s2510 = sadd.s32 1, %s2506
              $region111: #{grid_conv_forward.1} parent=104 // loop_footer_branch
                %2505 = sbr.rel target = $region107
              $region112: #{grid_conv_forward.1} parent=104 // loop_exit
                _
            $region105: #{grid_conv_forward.1} parent=96 // pred_fallthru
              _
          $region97: #{grid_conv_forward.1} parent=92 // pred_fallthru
            _
          %2533 = vnop
        $region93: #{grid_conv_forward.1} parent=76 // pred_fallthru
          _
      $region77: #{grid_conv_forward.1} parent=5 // pred_fallthru
        _
      %p2534 = scmp.le.s32.totalorder 2, %s15
      // Predicated region
      $region128: #{grid_conv_forward.1} parent=5 // pred_check
        %p2535 = pneg %p2534
      $region129: #{grid_conv_forward.1} parent=5 // pred_check_branch
        %2537 = sbr.rel (%p2535) target = $region131
      $region130: #{grid_conv_forward.1} parent=5 // pred_region
        %s2538 = ssub.s32 %s15, 2
        // Predicated region
        $region132: #{grid_conv_forward.1} parent=130 // pred_check
          %p2539 = pneg %p180
        $region133: #{grid_conv_forward.1} parent=130 // pred_check_branch
          %2541 = sbr.rel (%p2539) target = $region135
        $region134: #{grid_conv_forward.1} parent=130 // pred_region
          %s2542 = sand.u32 %s165, 1
          %s2543 = sand.u32 %s165, 1
          %s2544 = smul.addr %s2543, 16
          %s2545 = scalar_lea.vmem [#allocation7], %s2544
        $region135: #{grid_conv_forward.1} parent=130 // pred_fallthru
          _
      $region131: #{grid_conv_forward.1} parent=5 // pred_fallthru
        _
    $region6: #{grid_conv_forward.1} parent=1 // loop_footer
      %s19 = sadd.s32 1, %s15
    $region7: #{grid_conv_forward.1} parent=1 // loop_footer_branch
      %14 = sbr.rel target = $region3
    $region8: #{grid_conv_forward.1} parent=1 // loop_exit
      _
    %2546 = vsyncpa [#allocation4], 1
    %s2547 = scalar_lea.sflag [#allocation4], 1
    %2548 = vsyncpa %s2547, 1
    %2549 = vsyncpa [#allocation6], 1

</llo_original>
